<compile_context>
chip_gen: v6e
topology: v6e:2x2x1
jax: 0.10.0
libtpu: 0.0.40
codegen_flags: <defaults>
</compile_context>

<pallas_src>
import functools

import jax
import jax.numpy as jnp
import numpy as np
from jax.experimental import pallas as pl
from jax.experimental.pallas import tpu as pltpu


def masked_attention_kernel(x_ref, bias_ref, wqkv_ref, wprojh_ref, bproj_ref,
                            o_ref, *, num_heads):
    # x_ref:      (Bt, N1, C)   bf16
    # bias_ref:   (Bt, N1, N1)  f32 additive mask bias (0 or -f32max)
    # wqkv_ref:   (C, 3C)       bf16 (scale already folded into Q columns)
    # wprojh_ref: (H, hd, C)    bf16 (W_proj^T pre-split per head)
    # bproj_ref:  (1, C)        f32
    Bt, N1, C = x_ref.shape
    hd = C // num_heads

    # (1) One large QKV projection for all Bt*N1 rows in this block.
    x2 = x_ref[...].reshape(Bt * N1, C)                                   # bf16
    qkv = jnp.dot(x2, wqkv_ref[...],
                  preferred_element_type=jnp.float32)                     # (Bt*N1, 3C) f32

    bias = bias_ref[...]                                                  # (Bt, N1, N1)

    # (2) Per-head attention, batched over the Bt batch elements.
    y = jnp.zeros((Bt * N1, C), dtype=jnp.float32)
    for h in range(num_heads):                                            # static unroll
        q_h = qkv[:, h * hd:(h + 1) * hd]
        k_h = qkv[:, C + h * hd:C + (h + 1) * hd]
        v_h = qkv[:, 2 * C + h * hd:2 * C + (h + 1) * hd]
        q_h = q_h.reshape(Bt, N1, hd).astype(jnp.bfloat16)
        k_h = k_h.reshape(Bt, N1, hd).astype(jnp.bfloat16)
        v_h = v_h.reshape(Bt, N1, hd).astype(jnp.bfloat16)

        # scores (scale folded into Wq) + additive mask bias
        s = jnp.einsum('bqd,bkd->bqk', q_h, k_h,
                       preferred_element_type=jnp.float32)                # (Bt, N1, N1) f32
        s = s + bias

        # numerically-stable softmax; reciprocal goes to the EUP slot
        s = s - jnp.max(s, axis=-1, keepdims=True)
        p = jnp.exp(s)
        p = p * pl.reciprocal(jnp.sum(p, axis=-1, keepdims=True), approx=True)

        out_h = jnp.einsum('bqk,bkd->bqd', p.astype(jnp.bfloat16), v_h,
                           preferred_element_type=jnp.float32)            # (Bt, N1, hd)

        # (3) Head merge folded into the output projection (no lane concat).
        y = y + jnp.dot(out_h.reshape(Bt * N1, hd).astype(jnp.bfloat16),
                        wprojh_ref[h],
                        preferred_element_type=jnp.float32)               # (Bt*N1, C)

    y = y + bproj_ref[...]                                                # + proj bias
    # TODO(synk): output last dim is C (<128 lanes here) -> masked stores; a
    # lane-dense (Bt, N1*C) output slab would avoid them but needs a
    # sublane->lane reshape that we skip for lowering safety at these sizes.
    o_ref[...] = y.reshape(Bt, N1, C).astype(o_ref.dtype)


def _pick_block_batch(B, N1):
    """Largest divisor of B that (a) keeps Bt*N1 MXU-friendly and (b) leaves
    >= 2 grid steps when possible (so v7x's two TensorCores both get work)."""
    max_bt = max(1, min(64, 256 // max(1, N1)))
    candidates = [d for d in range(1, min(B, max_bt) + 1) if B % d == 0]
    two_step = [d for d in candidates if B // d >= 2]
    return max(two_step) if two_step else max(candidates)


def masked_attention(x, mask, w_qkv, w_proj, b_proj, num_heads, block_b=None):
    """x: (B, N1, N2, C) with N2 == 1 (required by the PyTorch reshape);
       mask: (B, N1) bool; weights in PyTorch Linear convention (out, in)."""
    B, N1, N2, C = x.shape
    assert N2 == 1, "PyTorch reshape in MaskedAttention.forward implies N2 == 1"
    assert C % num_heads == 0
    hd = C // num_heads
    scale = hd ** (-0.5)

    Bt = block_b if block_b is not None else _pick_block_batch(B, N1)
    assert B % Bt == 0

    # bf16 matmul operands, f32 accumulation in-kernel.
    x3 = x.reshape(B, N1, C).astype(jnp.bfloat16)

    # Fold the softmax scale into the Q rows of the fused QKV weight (host side).
    wq, wk, wv = w_qkv[:C], w_qkv[C:2 * C], w_qkv[2 * C:]
    wqkv_t = jnp.concatenate([wq * scale, wk, wv], axis=0).T.astype(jnp.bfloat16)   # (C, 3C)

    # Pre-split W_proj^T per head so the kernel can fold the head merge into the
    # projection: wproj_heads[h, d, :] == W_proj^T[h*hd + d, :].
    wproj_heads = w_proj.T.reshape(num_heads, hd, C).astype(jnp.bfloat16)           # (H, hd, C)
    b2 = b_proj.reshape(1, C).astype(jnp.float32)

    # Additive attention bias shared by all heads: 0 where attended, -f32max where masked.
    mask_b = mask.astype(bool)
    neg = -jnp.finfo(jnp.float32).max
    bias = jnp.where(mask_b[:, :, None] & mask_b[:, None, :], 0.0, neg)
    bias = bias.astype(jnp.float32)                                                 # (B, N1, N1)

    kernel = functools.partial(masked_attention_kernel, num_heads=num_heads)
    out = pl.pallas_call(
        kernel,
        out_shape=jax.ShapeDtypeStruct((B, N1, C), jnp.float32),
        grid_spec=pltpu.PrefetchScalarGridSpec(
            num_scalar_prefetch=0,
            grid=(B // Bt,),
            in_specs=[
                pl.BlockSpec((Bt, N1, C), lambda b: (b, 0, 0)),            # x (Bt batches/step)
                pl.BlockSpec((Bt, N1, N1), lambda b: (b, 0, 0)),           # additive mask bias
                pl.BlockSpec((C, 3 * C), lambda b: (0, 0)),                # W_qkv^T (resident)
                pl.BlockSpec((num_heads, hd, C), lambda b: (0, 0, 0)),     # W_proj^T per head
                pl.BlockSpec((1, C), lambda b: (0, 0)),                    # b_proj (resident)
            ],
            out_specs=pl.BlockSpec((Bt, N1, C), lambda b: (b, 0, 0)),
        ),
        compiler_params=pltpu.CompilerParams(
            dimension_semantics=("parallel",),                             # shard batch chunks
        ),
    )(x3, bias, wqkv_t, wproj_heads, b2)
    return out


def masked_attention_ref(x, mask, w_qkv, w_proj, b_proj, num_heads):
    """Pure-JAX f32 reference mirroring the PyTorch forward (eval mode)."""
    B, N1, N2, C = x.shape
    hd = C // num_heads
    scale = hd ** (-0.5)
    qkv = jnp.einsum('bnc,oc->bno', x.reshape(B, N1, C), w_qkv)              # (B,N1,3C)
    qkv = qkv.reshape(B, N1, 3, num_heads, hd).transpose(2, 0, 3, 1, 4)      # (3,B,H,N1,hd)
    q, k, v = qkv[0], qkv[1], qkv[2]
    attn = jnp.einsum('bhqd,bhkd->bhqk', q, k) * scale
    m2 = (mask[:, None, :] & mask[:, :, None])[:, None, :, :]                # (B,1,N1,N1)
    attn = jnp.where(m2, attn, -jnp.finfo(attn.dtype).max)
    attn = jax.nn.softmax(attn, axis=-1)
    out = jnp.einsum('bhqk,bhkd->bhqd', attn, v)
    out = out.transpose(0, 2, 1, 3).reshape(B, N1, C)
    return jnp.einsum('bnc,oc->bno', out, w_proj) + b_proj


if __name__ == "__main__":
    B, N1, N2, C, H = 8, 8, 1, 32, 4
    key = jax.random.PRNGKey(0)
    k1, k2, k3, k4, k5 = jax.random.split(key, 5)

    x = jax.random.normal(k1, (B, N1, N2, C), dtype=jnp.float32)
    # Deterministic parameter init mimicking torch.nn.Linear's uniform fan-in bound
    bound = 1.0 / (C ** 0.5)
    w_qkv = jax.random.uniform(k2, (3 * C, C), jnp.float32, -bound, bound)   # qkv.weight
    w_proj = jax.random.uniform(k3, (C, C), jnp.float32, -bound, bound)      # proj.weight
    b_proj = jax.random.uniform(k4, (C,), jnp.float32, -bound, bound)        # proj.bias
    mask = jax.random.uniform(k5, (B, N1)) > 0.3                             # bool mask

    out = masked_attention(x, mask, w_qkv, w_proj, b_proj, H)
    jax.block_until_ready(out)

    ref = masked_attention_ref(x, mask, w_qkv, w_proj, b_proj, H)
    # bf16 matmul operands (f32 accumulation) -> relaxed tolerance vs f32 reference.
    np.testing.assert_allclose(np.asarray(out), np.asarray(ref), rtol=3e-2, atol=3e-2)

    print("KERNEL_OK")
</pallas_src>

<mosaic_0001>
module attributes {stable_mosaic.version = 11 : i64} {
  func.func @masked_attention_kernel(%arg0: i32, %arg1: memref<4x8x32xbf16, #tpu.memory_space<vmem>>, %arg2: memref<4x8x8xf32, #tpu.memory_space<vmem>>, %arg3: memref<32x96xbf16, #tpu.memory_space<vmem>>, %arg4: memref<4x8x32xbf16, #tpu.memory_space<vmem>>, %arg5: memref<1x32xf32, #tpu.memory_space<vmem>>, %arg6: memref<4x8x32xf32, #tpu.memory_space<vmem>>) attributes {dimension_semantics = [#tpu.dimension_semantics<parallel>], iteration_bounds = array<i64: 2>, scalar_prefetch = 0 : i64, scratch_operands = 0 : i64, tpu.core_type = #tpu.core_type<tc>, window_params = [{transform_indices = @transform_0, window_bounds = array<i64: 4, 8, 32>}, {transform_indices = @transform_1, window_bounds = array<i64: 4, 8, 8>}, {pipeline_mode = #tpu.pipeline_mode<synchronous>, transform_indices = @transform_2, window_bounds = array<i64: 32, 96>}, {pipeline_mode = #tpu.pipeline_mode<synchronous>, transform_indices = @transform_3, window_bounds = array<i64: 4, 8, 32>}, {pipeline_mode = #tpu.pipeline_mode<synchronous>, transform_indices = @transform_4, window_bounds = array<i64: 1, 32>}, {transform_indices = @transform_5, window_bounds = array<i64: 4, 8, 32>}]} {
    %c0 = arith.constant 0 : index
    %c0_0 = arith.constant 0 : index
    %c0_1 = arith.constant 0 : index
    %0 = vector.load %arg1[%c0, %c0_0, %c0_1] : memref<4x8x32xbf16, #tpu.memory_space<vmem>>, vector<4x8x32xbf16>
    %1 = vector.shape_cast %0 : vector<4x8x32xbf16> to vector<32x32xbf16>
    %c0_2 = arith.constant 0 : index
    %c0_3 = arith.constant 0 : index
    %2 = vector.load %arg3[%c0_2, %c0_3] : memref<32x96xbf16, #tpu.memory_space<vmem>>, vector<32x96xbf16>
    %cst = arith.constant dense<0.000000e+00> : vector<32x96xf32>
    %3 = tpu.matmul %1, %2, %cst {dimension_numbers = #tpu.dot_dimension_numbers<[1], [0], [0], [1], [0, 0, 1, 1], [], []>} : vector<32x32xbf16>, vector<32x96xbf16>, vector<32x96xf32> -> vector<32x96xf32>
    %c0_4 = arith.constant 0 : index
    %c0_5 = arith.constant 0 : index
    %c0_6 = arith.constant 0 : index
    %4 = vector.load %arg2[%c0_4, %c0_5, %c0_6] : memref<4x8x8xf32, #tpu.memory_space<vmem>>, vector<4x8x8xf32>
    %cst_7 = arith.constant 0.000000e+00 : f32
    %5 = vector.broadcast %cst_7 : f32 to vector<32x32xf32>
    %6 = vector.extract_strided_slice %3 {offsets = [0, 0], sizes = [32, 8], strides = [1, 1]} : vector<32x96xf32> to vector<32x8xf32>
    %7 = vector.extract_strided_slice %3 {offsets = [0, 32], sizes = [32, 8], strides = [1, 1]} : vector<32x96xf32> to vector<32x8xf32>
    %8 = vector.extract_strided_slice %3 {offsets = [0, 64], sizes = [32, 8], strides = [1, 1]} : vector<32x96xf32> to vector<32x8xf32>
    %9 = vector.shape_cast %6 : vector<32x8xf32> to vector<4x8x8xf32>
    %10 = arith.truncf %9 : vector<4x8x8xf32> to vector<4x8x8xbf16>
    %11 = vector.shape_cast %7 : vector<32x8xf32> to vector<4x8x8xf32>
    %12 = arith.truncf %11 : vector<4x8x8xf32> to vector<4x8x8xbf16>
    %13 = vector.shape_cast %8 : vector<32x8xf32> to vector<4x8x8xf32>
    %14 = arith.truncf %13 : vector<4x8x8xf32> to vector<4x8x8xbf16>
    "tpu.trace_start"() <{level = 10 : i32, message = "bqd,bkd->bqk"}> : () -> ()
    %cst_8 = arith.constant dense<0.000000e+00> : vector<4x8x8xf32>
    %15 = tpu.matmul %10, %12, %cst_8 {dimension_numbers = #tpu.dot_dimension_numbers<[2], [2], [1], [1], [0, 0, 0, 1, 1, 1], [0], [0]>} : vector<4x8x8xbf16>, vector<4x8x8xbf16>, vector<4x8x8xf32> -> vector<4x8x8xf32>
    "tpu.trace_stop"() : () -> ()
    %16 = arith.addf %15, %4 : vector<4x8x8xf32>
    %cst_9 = arith.constant dense<0xFF800000> : vector<4x8xf32>
    %17 = vector.multi_reduction <maximumf>, %16, %cst_9 [2] : vector<4x8x8xf32> to vector<4x8xf32>
    %18 = vector.shape_cast %17 : vector<4x8xf32> to vector<4x8x1xf32>
    %19 = vector.broadcast %18 : vector<4x8x1xf32> to vector<4x8x8xf32>
    %20 = arith.subf %16, %19 : vector<4x8x8xf32>
    %21 = math.exp %20 : vector<4x8x8xf32>
    %cst_10 = arith.constant dense<0.000000e+00> : vector<4x8xf32>
    %22 = vector.multi_reduction <add>, %21, %cst_10 [2] : vector<4x8x8xf32> to vector<4x8xf32>
    %23 = vector.shape_cast %22 : vector<4x8xf32> to vector<4x8x1xf32>
    %24 = tpu.reciprocal %23 {approx = true} : vector<4x8x1xf32> -> vector<4x8x1xf32>
    %25 = vector.broadcast %24 : vector<4x8x1xf32> to vector<4x8x8xf32>
    %26 = arith.mulf %21, %25 : vector<4x8x8xf32>
    %27 = arith.truncf %26 : vector<4x8x8xf32> to vector<4x8x8xbf16>
    "tpu.trace_start"() <{level = 10 : i32, message = "bqk,bkd->bqd"}> : () -> ()
    %cst_11 = arith.constant dense<0.000000e+00> : vector<4x8x8xf32>
    %28 = tpu.matmul %27, %14, %cst_11 {dimension_numbers = #tpu.dot_dimension_numbers<[2], [1], [1], [2], [0, 0, 0, 1, 1, 2], [0], [0]>} : vector<4x8x8xbf16>, vector<4x8x8xbf16>, vector<4x8x8xf32> -> vector<4x8x8xf32>
    "tpu.trace_stop"() : () -> ()
    %29 = vector.shape_cast %28 : vector<4x8x8xf32> to vector<32x8xf32>
    %30 = arith.truncf %29 : vector<32x8xf32> to vector<32x8xbf16>
    %c0_12 = arith.constant 0 : index
    %c0_13 = arith.constant 0 : index
    %c0_14 = arith.constant 0 : index
    %31 = vector.load %arg4[%c0_12, %c0_13, %c0_14] : memref<4x8x32xbf16, #tpu.memory_space<vmem>>, vector<1x8x32xbf16>
    %32 = vector.shape_cast %31 : vector<1x8x32xbf16> to vector<8x32xbf16>
    %cst_15 = arith.constant dense<0.000000e+00> : vector<32x32xf32>
    %33 = tpu.matmul %30, %32, %cst_15 {dimension_numbers = #tpu.dot_dimension_numbers<[1], [0], [0], [1], [0, 0, 1, 1], [], []>} : vector<32x8xbf16>, vector<8x32xbf16>, vector<32x32xf32> -> vector<32x32xf32>
    %34 = arith.addf %5, %33 : vector<32x32xf32>
    %35 = vector.extract_strided_slice %3 {offsets = [0, 8], sizes = [32, 8], strides = [1, 1]} : vector<32x96xf32> to vector<32x8xf32>
    %36 = vector.extract_strided_slice %3 {offsets = [0, 40], sizes = [32, 8], strides = [1, 1]} : vector<32x96xf32> to vector<32x8xf32>
    %37 = vector.extract_strided_slice %3 {offsets = [0, 72], sizes = [32, 8], strides = [1, 1]} : vector<32x96xf32> to vector<32x8xf32>
    %38 = vector.shape_cast %35 : vector<32x8xf32> to vector<4x8x8xf32>
    %39 = arith.truncf %38 : vector<4x8x8xf32> to vector<4x8x8xbf16>
    %40 = vector.shape_cast %36 : vector<32x8xf32> to vector<4x8x8xf32>
    %41 = arith.truncf %40 : vector<4x8x8xf32> to vector<4x8x8xbf16>
    %42 = vector.shape_cast %37 : vector<32x8xf32> to vector<4x8x8xf32>
    %43 = arith.truncf %42 : vector<4x8x8xf32> to vector<4x8x8xbf16>
    "tpu.trace_start"() <{level = 10 : i32, message = "bqd,bkd->bqk"}> : () -> ()
    %cst_16 = arith.constant dense<0.000000e+00> : vector<4x8x8xf32>
    %44 = tpu.matmul %39, %41, %cst_16 {dimension_numbers = #tpu.dot_dimension_numbers<[2], [2], [1], [1], [0, 0, 0, 1, 1, 1], [0], [0]>} : vector<4x8x8xbf16>, vector<4x8x8xbf16>, vector<4x8x8xf32> -> vector<4x8x8xf32>
    "tpu.trace_stop"() : () -> ()
    %45 = arith.addf %44, %4 : vector<4x8x8xf32>
    %cst_17 = arith.constant dense<0xFF800000> : vector<4x8xf32>
    %46 = vector.multi_reduction <maximumf>, %45, %cst_17 [2] : vector<4x8x8xf32> to vector<4x8xf32>
    %47 = vector.shape_cast %46 : vector<4x8xf32> to vector<4x8x1xf32>
    %48 = vector.broadcast %47 : vector<4x8x1xf32> to vector<4x8x8xf32>
    %49 = arith.subf %45, %48 : vector<4x8x8xf32>
    %50 = math.exp %49 : vector<4x8x8xf32>
    %cst_18 = arith.constant dense<0.000000e+00> : vector<4x8xf32>
    %51 = vector.multi_reduction <add>, %50, %cst_18 [2] : vector<4x8x8xf32> to vector<4x8xf32>
    %52 = vector.shape_cast %51 : vector<4x8xf32> to vector<4x8x1xf32>
    %53 = tpu.reciprocal %52 {approx = true} : vector<4x8x1xf32> -> vector<4x8x1xf32>
    %54 = vector.broadcast %53 : vector<4x8x1xf32> to vector<4x8x8xf32>
    %55 = arith.mulf %50, %54 : vector<4x8x8xf32>
    %56 = arith.truncf %55 : vector<4x8x8xf32> to vector<4x8x8xbf16>
    "tpu.trace_start"() <{level = 10 : i32, message = "bqk,bkd->bqd"}> : () -> ()
    %cst_19 = arith.constant dense<0.000000e+00> : vector<4x8x8xf32>
    %57 = tpu.matmul %56, %43, %cst_19 {dimension_numbers = #tpu.dot_dimension_numbers<[2], [1], [1], [2], [0, 0, 0, 1, 1, 2], [0], [0]>} : vector<4x8x8xbf16>, vector<4x8x8xbf16>, vector<4x8x8xf32> -> vector<4x8x8xf32>
    "tpu.trace_stop"() : () -> ()
    %58 = vector.shape_cast %57 : vector<4x8x8xf32> to vector<32x8xf32>
    %59 = arith.truncf %58 : vector<32x8xf32> to vector<32x8xbf16>
    %c1 = arith.constant 1 : index
    %c0_20 = arith.constant 0 : index
    %c0_21 = arith.constant 0 : index
    %60 = vector.load %arg4[%c1, %c0_20, %c0_21] : memref<4x8x32xbf16, #tpu.memory_space<vmem>>, vector<1x8x32xbf16>
    %61 = vector.shape_cast %60 : vector<1x8x32xbf16> to vector<8x32xbf16>
    %cst_22 = arith.constant dense<0.000000e+00> : vector<32x32xf32>
    %62 = tpu.matmul %59, %61, %cst_22 {dimension_numbers = #tpu.dot_dimension_numbers<[1], [0], [0], [1], [0, 0, 1, 1], [], []>} : vector<32x8xbf16>, vector<8x32xbf16>, vector<32x32xf32> -> vector<32x32xf32>
    %63 = arith.addf %34, %62 : vector<32x32xf32>
    %64 = vector.extract_strided_slice %3 {offsets = [0, 16], sizes = [32, 8], strides = [1, 1]} : vector<32x96xf32> to vector<32x8xf32>
    %65 = vector.extract_strided_slice %3 {offsets = [0, 48], sizes = [32, 8], strides = [1, 1]} : vector<32x96xf32> to vector<32x8xf32>
    %66 = vector.extract_strided_slice %3 {offsets = [0, 80], sizes = [32, 8], strides = [1, 1]} : vector<32x96xf32> to vector<32x8xf32>
    %67 = vector.shape_cast %64 : vector<32x8xf32> to vector<4x8x8xf32>
    %68 = arith.truncf %67 : vector<4x8x8xf32> to vector<4x8x8xbf16>
    %69 = vector.shape_cast %65 : vector<32x8xf32> to vector<4x8x8xf32>
    %70 = arith.truncf %69 : vector<4x8x8xf32> to vector<4x8x8xbf16>
    %71 = vector.shape_cast %66 : vector<32x8xf32> to vector<4x8x8xf32>
    %72 = arith.truncf %71 : vector<4x8x8xf32> to vector<4x8x8xbf16>
    "tpu.trace_start"() <{level = 10 : i32, message = "bqd,bkd->bqk"}> : () -> ()
    %cst_23 = arith.constant dense<0.000000e+00> : vector<4x8x8xf32>
    %73 = tpu.matmul %68, %70, %cst_23 {dimension_numbers = #tpu.dot_dimension_numbers<[2], [2], [1], [1], [0, 0, 0, 1, 1, 1], [0], [0]>} : vector<4x8x8xbf16>, vector<4x8x8xbf16>, vector<4x8x8xf32> -> vector<4x8x8xf32>
    "tpu.trace_stop"() : () -> ()
    %74 = arith.addf %73, %4 : vector<4x8x8xf32>
    %cst_24 = arith.constant dense<0xFF800000> : vector<4x8xf32>
    %75 = vector.multi_reduction <maximumf>, %74, %cst_24 [2] : vector<4x8x8xf32> to vector<4x8xf32>
    %76 = vector.shape_cast %75 : vector<4x8xf32> to vector<4x8x1xf32>
    %77 = vector.broadcast %76 : vector<4x8x1xf32> to vector<4x8x8xf32>
    %78 = arith.subf %74, %77 : vector<4x8x8xf32>
    %79 = math.exp %78 : vector<4x8x8xf32>
    %cst_25 = arith.constant dense<0.000000e+00> : vector<4x8xf32>
    %80 = vector.multi_reduction <add>, %79, %cst_25 [2] : vector<4x8x8xf32> to vector<4x8xf32>
    %81 = vector.shape_cast %80 : vector<4x8xf32> to vector<4x8x1xf32>
    %82 = tpu.reciprocal %81 {approx = true} : vector<4x8x1xf32> -> vector<4x8x1xf32>
    %83 = vector.broadcast %82 : vector<4x8x1xf32> to vector<4x8x8xf32>
    %84 = arith.mulf %79, %83 : vector<4x8x8xf32>
    %85 = arith.truncf %84 : vector<4x8x8xf32> to vector<4x8x8xbf16>
    "tpu.trace_start"() <{level = 10 : i32, message = "bqk,bkd->bqd"}> : () -> ()
    %cst_26 = arith.constant dense<0.000000e+00> : vector<4x8x8xf32>
    %86 = tpu.matmul %85, %72, %cst_26 {dimension_numbers = #tpu.dot_dimension_numbers<[2], [1], [1], [2], [0, 0, 0, 1, 1, 2], [0], [0]>} : vector<4x8x8xbf16>, vector<4x8x8xbf16>, vector<4x8x8xf32> -> vector<4x8x8xf32>
    "tpu.trace_stop"() : () -> ()
    %87 = vector.shape_cast %86 : vector<4x8x8xf32> to vector<32x8xf32>
    %88 = arith.truncf %87 : vector<32x8xf32> to vector<32x8xbf16>
    %c2 = arith.constant 2 : index
    %c0_27 = arith.constant 0 : index
    %c0_28 = arith.constant 0 : index
    %89 = vector.load %arg4[%c2, %c0_27, %c0_28] : memref<4x8x32xbf16, #tpu.memory_space<vmem>>, vector<1x8x32xbf16>
    %90 = vector.shape_cast %89 : vector<1x8x32xbf16> to vector<8x32xbf16>
    %cst_29 = arith.constant dense<0.000000e+00> : vector<32x32xf32>
    %91 = tpu.matmul %88, %90, %cst_29 {dimension_numbers = #tpu.dot_dimension_numbers<[1], [0], [0], [1], [0, 0, 1, 1], [], []>} : vector<32x8xbf16>, vector<8x32xbf16>, vector<32x32xf32> -> vector<32x32xf32>
    %92 = arith.addf %63, %91 : vector<32x32xf32>
    %93 = vector.extract_strided_slice %3 {offsets = [0, 24], sizes = [32, 8], strides = [1, 1]} : vector<32x96xf32> to vector<32x8xf32>
    %94 = vector.extract_strided_slice %3 {offsets = [0, 56], sizes = [32, 8], strides = [1, 1]} : vector<32x96xf32> to vector<32x8xf32>
    %95 = vector.extract_strided_slice %3 {offsets = [0, 88], sizes = [32, 8], strides = [1, 1]} : vector<32x96xf32> to vector<32x8xf32>
    %96 = vector.shape_cast %93 : vector<32x8xf32> to vector<4x8x8xf32>
    %97 = arith.truncf %96 : vector<4x8x8xf32> to vector<4x8x8xbf16>
    %98 = vector.shape_cast %94 : vector<32x8xf32> to vector<4x8x8xf32>
    %99 = arith.truncf %98 : vector<4x8x8xf32> to vector<4x8x8xbf16>
    %100 = vector.shape_cast %95 : vector<32x8xf32> to vector<4x8x8xf32>
    %101 = arith.truncf %100 : vector<4x8x8xf32> to vector<4x8x8xbf16>
    "tpu.trace_start"() <{level = 10 : i32, message = "bqd,bkd->bqk"}> : () -> ()
    %cst_30 = arith.constant dense<0.000000e+00> : vector<4x8x8xf32>
    %102 = tpu.matmul %97, %99, %cst_30 {dimension_numbers = #tpu.dot_dimension_numbers<[2], [2], [1], [1], [0, 0, 0, 1, 1, 1], [0], [0]>} : vector<4x8x8xbf16>, vector<4x8x8xbf16>, vector<4x8x8xf32> -> vector<4x8x8xf32>
    "tpu.trace_stop"() : () -> ()
    %103 = arith.addf %102, %4 : vector<4x8x8xf32>
    %cst_31 = arith.constant dense<0xFF800000> : vector<4x8xf32>
    %104 = vector.multi_reduction <maximumf>, %103, %cst_31 [2] : vector<4x8x8xf32> to vector<4x8xf32>
    %105 = vector.shape_cast %104 : vector<4x8xf32> to vector<4x8x1xf32>
    %106 = vector.broadcast %105 : vector<4x8x1xf32> to vector<4x8x8xf32>
    %107 = arith.subf %103, %106 : vector<4x8x8xf32>
    %108 = math.exp %107 : vector<4x8x8xf32>
    %cst_32 = arith.constant dense<0.000000e+00> : vector<4x8xf32>
    %109 = vector.multi_reduction <add>, %108, %cst_32 [2] : vector<4x8x8xf32> to vector<4x8xf32>
    %110 = vector.shape_cast %109 : vector<4x8xf32> to vector<4x8x1xf32>
    %111 = tpu.reciprocal %110 {approx = true} : vector<4x8x1xf32> -> vector<4x8x1xf32>
    %112 = vector.broadcast %111 : vector<4x8x1xf32> to vector<4x8x8xf32>
    %113 = arith.mulf %108, %112 : vector<4x8x8xf32>
    %114 = arith.truncf %113 : vector<4x8x8xf32> to vector<4x8x8xbf16>
    "tpu.trace_start"() <{level = 10 : i32, message = "bqk,bkd->bqd"}> : () -> ()
    %cst_33 = arith.constant dense<0.000000e+00> : vector<4x8x8xf32>
    %115 = tpu.matmul %114, %101, %cst_33 {dimension_numbers = #tpu.dot_dimension_numbers<[2], [1], [1], [2], [0, 0, 0, 1, 1, 2], [0], [0]>} : vector<4x8x8xbf16>, vector<4x8x8xbf16>, vector<4x8x8xf32> -> vector<4x8x8xf32>
    "tpu.trace_stop"() : () -> ()
    %116 = vector.shape_cast %115 : vector<4x8x8xf32> to vector<32x8xf32>
    %117 = arith.truncf %116 : vector<32x8xf32> to vector<32x8xbf16>
    %c3 = arith.constant 3 : index
    %c0_34 = arith.constant 0 : index
    %c0_35 = arith.constant 0 : index
    %118 = vector.load %arg4[%c3, %c0_34, %c0_35] : memref<4x8x32xbf16, #tpu.memory_space<vmem>>, vector<1x8x32xbf16>
    %119 = vector.shape_cast %118 : vector<1x8x32xbf16> to vector<8x32xbf16>
    %cst_36 = arith.constant dense<0.000000e+00> : vector<32x32xf32>
    %120 = tpu.matmul %117, %119, %cst_36 {dimension_numbers = #tpu.dot_dimension_numbers<[1], [0], [0], [1], [0, 0, 1, 1], [], []>} : vector<32x8xbf16>, vector<8x32xbf16>, vector<32x32xf32> -> vector<32x32xf32>
    %121 = arith.addf %92, %120 : vector<32x32xf32>
    %c0_37 = arith.constant 0 : index
    %c0_38 = arith.constant 0 : index
    %122 = vector.load %arg5[%c0_37, %c0_38] : memref<1x32xf32, #tpu.memory_space<vmem>>, vector<1x32xf32>
    %123 = vector.broadcast %122 : vector<1x32xf32> to vector<32x32xf32>
    %124 = arith.addf %121, %123 : vector<32x32xf32>
    %125 = vector.shape_cast %124 : vector<32x32xf32> to vector<4x8x32xf32>
    %c0_39 = arith.constant 0 : index
    %c0_40 = arith.constant 0 : index
    %c0_41 = arith.constant 0 : index
    %126 = vector.load %arg6[%c0_39, %c0_40, %c0_41] : memref<4x8x32xf32, #tpu.memory_space<vmem>>, vector<4x8x32xf32>
    tpu.vector_store %arg6[%c0_39, %c0_40, %c0_41], %125 {strides = array<i32>} : memref<4x8x32xf32, #tpu.memory_space<vmem>>, vector<4x8x32xf32>,
    return
  }
  func.func @transform_0(%arg0: i32) -> (i32, i32, i32) {
    %c0_i32 = arith.constant 0 : i32
    %c0_i32_0 = arith.constant 0 : i32
    %c0_i32_1 = arith.constant 0 : i32
    return %arg0, %c0_i32, %c0_i32_0 : i32, i32, i32
  }
  func.func @transform_1(%arg0: i32) -> (i32, i32, i32) {
    %c0_i32 = arith.constant 0 : i32
    %c0_i32_0 = arith.constant 0 : i32
    %c0_i32_1 = arith.constant 0 : i32
    return %arg0, %c0_i32, %c0_i32_0 : i32, i32, i32
  }
  func.func @transform_2(%arg0: i32) -> (i32, i32) {
    %c0_i32 = arith.constant 0 : i32
    %c0_i32_0 = arith.constant 0 : i32
    %c0_i32_1 = arith.constant 0 : i32
    return %c0_i32, %c0_i32_0 : i32, i32
  }
  func.func @transform_3(%arg0: i32) -> (i32, i32, i32) {
    %c0_i32 = arith.constant 0 : i32
    %c0_i32_0 = arith.constant 0 : i32
    %c0_i32_1 = arith.constant 0 : i32
    %c0_i32_2 = arith.constant 0 : i32
    return %c0_i32, %c0_i32_0, %c0_i32_1 : i32, i32, i32
  }
  func.func @transform_4(%arg0: i32) -> (i32, i32) {
    %c0_i32 = arith.constant 0 : i32
    %c0_i32_0 = arith.constant 0 : i32
    %c0_i32_1 = arith.constant 0 : i32
    return %c0_i32, %c0_i32_0 : i32, i32
  }
  func.func @transform_5(%arg0: i32) -> (i32, i32, i32) {
    %c0_i32 = arith.constant 0 : i32
    %c0_i32_0 = arith.constant 0 : i32
    %c0_i32_1 = arith.constant 0 : i32
    return %arg0, %c0_i32, %c0_i32_0 : i32, i32, i32
  }
}

</mosaic_0001>

<llo_original>
// kernel: tpu_custom_call.1
$region0: #{tpu_custom_call.1}
  #allocation0 [shape = 'u32[]', space=smem, size = 0x4, offset = 0x4, fixed_abs, tag = 'smem constant byte address 0x4 - core index']
  #allocation1 [shape = 'u32[144,128]{1,0:T(1,128)}', space=vmem, size = 0x12000, scoped, tag = 'internal scratch']
  %s0 = inlined_call_operand.hbm [shape: bf16[8,8,32], index: 0, kind: input, shape index: {}]
  %s1 = inlined_call_operand.hbm [shape: f32[8,8,8], index: 1, kind: input, shape index: {}]
  %s2 = inlined_call_operand.hbm [shape: bf16[32,96], index: 2, kind: input, shape index: {}]
  %s3 = inlined_call_operand.hbm [shape: bf16[4,8,32], index: 3, kind: input, shape index: {}]
  %s4 = inlined_call_operand.vmem [shape: f32[1,32], index: 4, kind: input, shape index: {}]
  %s5 = inlined_call_operand.hbm [shape: f32[8,8,32], index: 5, kind: output, shape index: {}]
  %s6 = sld [smem:[#allocation0]]
  $region69: #{tpu_custom_call.1} parent=0
    _
  %s8 = ssub.s32 1, %s6
  %s9 = scalar_select 0, %s8, %s6
  $region1: #{tpu_custom_call.1} parent=0
    #allocation2 [shape = 'u8[16384]{0}', space=vmem, size = 0x4000, scoped, tag = 'input window, operand 0']
    #allocation3 [shape = 's32[2]{0}', space=sflag, size = 0x8, scoped, tag = 'scoped memory for tpu_custom_call.1']
    #allocation4 [shape = 's32[2]{0}', space=sflag, size = 0x8, scoped, tag = 'scoped memory for tpu_custom_call.1']
    #allocation5 [shape = 'u8[32768]{0}', space=vmem, size = 0x8000, scoped, tag = 'input window, operand 1']
    #allocation6 [shape = 's32[2]{0}', space=sflag, size = 0x8, scoped, tag = 'scoped memory for tpu_custom_call.1']
    #allocation7 [shape = 'u8[8192]{0}', space=vmem, size = 0x2000, scoped, tag = 'input window, operand 2, single buffered']
    #allocation8 [shape = 'u8[8192]{0}', space=vmem, size = 0x2000, scoped, tag = 'input window, operand 3, single buffered']
    #allocation9 [shape = 's32[1]{0}', space=sflag, size = 0x4, scoped, tag = 'scoped memory for tpu_custom_call.1']
    #allocation10 [shape = 'u8[32768]{0}', space=vmem, size = 0x8000, scoped, tag = 'output window, operand 0']
    %10 = vsyncpa [#allocation3], 0
    %s11 = scalar_lea.sflag [#allocation3], 1
    %12 = vsyncpa %s11, 0
    %13 = vsyncpa [#allocation6], 0
    %s14 = scalar_lea.sflag [#allocation6], 1
    %15 = vsyncpa %s14, 0
    %16 = vsyncpa [#allocation9], 0
    %17 = vsyncpa [#allocation4], 0
    %s18 = scalar_lea.sflag [#allocation4], 1
    %19 = vsyncpa %s18, 0
    loop: start=0, step=1, limit=4
    $region2: #{tpu_custom_call.1} parent=1 // loop_pre_header
      _
    $region3: #{tpu_custom_call.1} parent=1 // loop_header
      %s21 = sphi 0, %s25
      %p22 = scmp.ge.s32.totalorder %s21, 4
      %s31 = sphi 0, %s33
      %s34 = sphi 0, %s31
      %s35 = sphi 0, %s34
      %s51 = sphi 0, %s35
      %s57 = sphi 0, %s59
      %s60 = sphi 0, %s57
      %s61 = sphi 0, %s60
      %s77 = sphi 0, %s61
      %s81 = sphi 0, %s81
      %s83 = sphi 0, %s81
      %s84 = sphi 0, %s83
      %s98 = sphi 0, %s84
      %s102 = sphi 0, %s102
      %s104 = sphi 0, %s102
      %s105 = sphi 0, %s104
      %s119 = sphi 0, %s105
      %s123 = sphi 0, %s123
      %s125 = sphi 0, %s123
      %s126 = sphi 0, %s125
      %s140 = sphi 0, %s126
      %s146 = sphi 0, %s148
      %s149 = sphi 0, %s146
      %s150 = sphi 0, %s149
      %s166 = sphi 0, %s150
    $region4: #{tpu_custom_call.1} parent=1 // loop_header_branch
      %24 = sbr.rel (%p22) target = $region8
    $region5: #{tpu_custom_call.1} parent=1 // loop_body
      %s26 = ssub.s32 %s21, 1
      %s27 = ssub.s32 %s21, 2
      %s28 = sadd.s32 %s21, 1
      %s29 = ssub.s32 %s21, %s28
      %p30 = scmp.eq.s32.totalorder %s29, 0
      %s32 = sadd.s32 %s31, 1
      %s33 = scalar_select %p30, %s31, %s32
      %p36 = pneg %p30
      %p37 = scmp.eq.s32.totalorder %s21, 1
      %p38 = por %p36, %p37
      %p39 = scmp.ne.s32.totalorder %s31, %s34
      %p40 = scmp.eq.s32.totalorder %s21, 0
      %p41 = por %p39, %p40
      %p42 = scmp.ne.s32.totalorder %s31, %s34
      %p43 = scmp.eq.s32.totalorder %s26, 1
      %p44 = por %p42, %p43
      %p45 = scmp.ne.s32.totalorder %s34, %s35
      %p46 = scmp.eq.s32.totalorder %s26, 0
      %p47 = por %p45, %p46
      %p48 = scmp.ne.s32.totalorder %s34, %s35
      %p49 = scmp.eq.s32.totalorder %s27, 1
      %p50 = por %p48, %p49
      %p52 = scmp.ne.s32.totalorder %s35, %s51
      %p53 = scmp.eq.s32.totalorder %s27, 0
      %p54 = por %p52, %p53
      %s55 = ssub.s32 %s21, %s28
      %p56 = scmp.eq.s32.totalorder %s55, 0
      %s58 = sadd.s32 %s57, 1
      %s59 = scalar_select %p56, %s57, %s58
      %p62 = pneg %p56
      %p63 = scmp.eq.s32.totalorder %s21, 1
      %p64 = por %p62, %p63
      %p65 = scmp.ne.s32.totalorder %s57, %s60
      %p66 = scmp.eq.s32.totalorder %s21, 0
      %p67 = por %p65, %p66
      %p68 = scmp.ne.s32.totalorder %s57, %s60
      %p69 = scmp.eq.s32.totalorder %s26, 1
      %p70 = por %p68, %p69
      %p71 = scmp.ne.s32.totalorder %s60, %s61
      %p72 = scmp.eq.s32.totalorder %s26, 0
      %p73 = por %p71, %p72
      %p74 = scmp.ne.s32.totalorder %s60, %s61
      %p75 = scmp.eq.s32.totalorder %s27, 1
      %p76 = por %p74, %p75
      %p78 = scmp.ne.s32.totalorder %s61, %s77
      %p79 = scmp.eq.s32.totalorder %s27, 0
      %p80 = por %p78, %p79
      %s82 = sadd.s32 %s81, 1
      %p85 = scmp.eq.s32.totalorder %s21, 1
      %p86 = scmp.ne.s32.totalorder %s81, %s83
      %p87 = scmp.eq.s32.totalorder %s21, 0
      %p88 = por %p86, %p87
      %p89 = scmp.ne.s32.totalorder %s81, %s83
      %p90 = scmp.eq.s32.totalorder %s26, 1
      %p91 = por %p89, %p90
      %p92 = scmp.ne.s32.totalorder %s83, %s84
      %p93 = scmp.eq.s32.totalorder %s26, 0
      %p94 = por %p92, %p93
      %p95 = scmp.ne.s32.totalorder %s83, %s84
      %p96 = scmp.eq.s32.totalorder %s27, 1
      %p97 = por %p95, %p96
      %p99 = scmp.ne.s32.totalorder %s84, %s98
      %p100 = scmp.eq.s32.totalorder %s27, 0
      %p101 = por %p99, %p100
      %s103 = sadd.s32 %s102, 1
      %p106 = scmp.eq.s32.totalorder %s21, 1
      %p107 = scmp.ne.s32.totalorder %s102, %s104
      %p108 = scmp.eq.s32.totalorder %s21, 0
      %p109 = por %p107, %p108
      %p110 = scmp.ne.s32.totalorder %s102, %s104
      %p111 = scmp.eq.s32.totalorder %s26, 1
      %p112 = por %p110, %p111
      %p113 = scmp.ne.s32.totalorder %s104, %s105
      %p114 = scmp.eq.s32.totalorder %s26, 0
      %p115 = por %p113, %p114
      %p116 = scmp.ne.s32.totalorder %s104, %s105
      %p117 = scmp.eq.s32.totalorder %s27, 1
      %p118 = por %p116, %p117
      %p120 = scmp.ne.s32.totalorder %s105, %s119
      %p121 = scmp.eq.s32.totalorder %s27, 0
      %p122 = por %p120, %p121
      %s124 = sadd.s32 %s123, 1
      %p127 = scmp.eq.s32.totalorder %s21, 1
      %p128 = scmp.ne.s32.totalorder %s123, %s125
      %p129 = scmp.eq.s32.totalorder %s21, 0
      %p130 = por %p128, %p129
      %p131 = scmp.ne.s32.totalorder %s123, %s125
      %p132 = scmp.eq.s32.totalorder %s26, 1
      %p133 = por %p131, %p132
      %p134 = scmp.ne.s32.totalorder %s125, %s126
      %p135 = scmp.eq.s32.totalorder %s26, 0
      %p136 = por %p134, %p135
      %p137 = scmp.ne.s32.totalorder %s125, %s126
      %p138 = scmp.eq.s32.totalorder %s27, 1
      %p139 = por %p137, %p138
      %p141 = scmp.ne.s32.totalorder %s126, %s140
      %p142 = scmp.eq.s32.totalorder %s27, 0
      %p143 = por %p141, %p142
      %s144 = ssub.s32 %s21, %s28
      %p145 = scmp.eq.s32.totalorder %s144, 0
      %s147 = sadd.s32 %s146, 1
      %s148 = scalar_select %p145, %s146, %s147
      %p151 = pneg %p145
      %p152 = scmp.eq.s32.totalorder %s21, 1
      %p153 = por %p151, %p152
      %p154 = scmp.ne.s32.totalorder %s146, %s149
      %p155 = scmp.eq.s32.totalorder %s21, 0
      %p156 = por %p154, %p155
      %p157 = scmp.ne.s32.totalorder %s146, %s149
      %p158 = scmp.eq.s32.totalorder %s26, 1
      %p159 = por %p157, %p158
      %p160 = scmp.ne.s32.totalorder %s149, %s150
      %p161 = scmp.eq.s32.totalorder %s26, 0
      %p162 = por %p160, %p161
      %p163 = scmp.ne.s32.totalorder %s149, %s150
      %p164 = scmp.eq.s32.totalorder %s27, 1
      %p165 = por %p163, %p164
      %p167 = scmp.ne.s32.totalorder %s150, %s166
      %p168 = scmp.eq.s32.totalorder %s27, 0
      %p169 = por %p167, %p168
      %p170 = scmp.le.s32.totalorder 1, %s21
      %p171 = scmp.lt.s32.totalorder %s21, 3
      %p172 = pnand %p170, %p171
      %p173 = pneg %p172
      // Predicated region
      $region9: #{tpu_custom_call.1} parent=5 // pred_check
        _
      $region10: #{tpu_custom_call.1} parent=5 // pred_check_branch
        %175 = sbr.rel (%p172) target = $region12
      $region11: #{tpu_custom_call.1} parent=5 // pred_region
        %s176 = ssub.s32 %s21, 1
        // Predicated region
        $region13: #{tpu_custom_call.1} parent=11 // pred_check
          %p177 = pneg %p94
        $region14: #{tpu_custom_call.1} parent=11 // pred_check_branch
          %179 = sbr.rel (%p177) target = $region16
        $region15: #{tpu_custom_call.1} parent=11 // pred_region
          %s181 = ssub.s32 256, 256
          %182 = vsyncadd [#allocation6], %s181
          %s183 = sshll.u32 [#allocation7], 4
          %s184 = int_to_ptr.vmem [resolvable:$true] %s183
          %189 = dma.hbm_to_vmem [thread:$0]  %s2, 256, %s184, [#allocation6], 64, 64, 4
        $region16: #{tpu_custom_call.1} parent=11 // pred_fallthru
          _
        // Predicated region
        $region17: #{tpu_custom_call.1} parent=11 // pred_check
          %p190 = pneg %p115
        $region18: #{tpu_custom_call.1} parent=11 // pred_check_branch
          %192 = sbr.rel (%p190) target = $region20
        $region19: #{tpu_custom_call.1} parent=11 // pred_region
          %s194 = ssub.s32 256, 256
          %195 = vsyncadd [#allocation9], %s194
          %s196 = sshll.u32 [#allocation8], 4
          %s197 = int_to_ptr.vmem [resolvable:$true] %s196
          %202 = dma.hbm_to_vmem [thread:$0]  %s3, 256, %s197, [#allocation9], 64, 64, 4
        $region20: #{tpu_custom_call.1} parent=11 // pred_fallthru
          _
        // Predicated region
        $region21: #{tpu_custom_call.1} parent=11 // pred_check
          %p203 = pneg %p136
        $region22: #{tpu_custom_call.1} parent=11 // pred_check_branch
          %205 = sbr.rel (%p203) target = $region24
        $region23: #{tpu_custom_call.1} parent=11 // pred_region
          _
        $region24: #{tpu_custom_call.1} parent=11 // pred_fallthru
          _
      $region12: #{tpu_custom_call.1} parent=5 // pred_fallthru
        _
      %p206 = scmp.lt.s32.totalorder %s21, 2
      // Predicated region
      $region25: #{tpu_custom_call.1} parent=5 // pred_check
        %p207 = pneg %p206
      $region26: #{tpu_custom_call.1} parent=5 // pred_check_branch
        %209 = sbr.rel (%p207) target = $region28
      $region27: #{tpu_custom_call.1} parent=5 // pred_region
        // Predicated region
        $region29: #{tpu_custom_call.1} parent=27 // pred_check
          %p210 = pneg %p41
        $region30: #{tpu_custom_call.1} parent=27 // pred_check_branch
          %212 = sbr.rel (%p210) target = $region32
        $region31: #{tpu_custom_call.1} parent=27 // pred_region
          %s213 = sand.u32 %s31, 1
          %s214 = scalar_lea.sflag [#allocation3], %s213
          %s215 = sand.u32 %s31, 1
          %s216 = smul.addr %s215, 16
          %s217 = scalar_lea.vmem [#allocation2], %s216
          %s218 = smul.u32 4, %s21
          %s220 = ssub.s32 256, 256
          %221 = vsyncadd %s214, %s220
          %s222 = smul.addr %s218, 64
          %s223 = scalar_lea.hbm %s0, %s222
          %s224 = sshll.u32 %s217, 4
          %s225 = int_to_ptr.vmem [resolvable:$true] %s224
          %230 = dma.hbm_to_vmem [thread:$0]  %s223, 256, %s225, %s214, 64, 64, 4
        $region32: #{tpu_custom_call.1} parent=27 // pred_fallthru
          _
        // Predicated region
        $region33: #{tpu_custom_call.1} parent=27 // pred_check
          %p231 = pneg %p67
        $region34: #{tpu_custom_call.1} parent=27 // pred_check_branch
          %233 = sbr.rel (%p231) target = $region36
        $region35: #{tpu_custom_call.1} parent=27 // pred_region
          %s234 = sand.u32 %s21, 1
          %s235 = scalar_lea.sflag [#allocation6], %s234
          %s236 = sand.u32 %s57, 1
          %s237 = smul.addr %s236, 32
          %s238 = scalar_lea.vmem [#allocation5], %s237
          %s239 = smul.u32 4, %s21
          %s241 = ssub.s32 512, 512
          %242 = vsyncadd %s235, %s241
          %s243 = smul.addr %s239, 128
          %s244 = scalar_lea.hbm %s1, %s243
          %s245 = sshll.u32 %s238, 4
          %s246 = int_to_ptr.vmem [resolvable:$true] %s245
          %251 = dma.hbm_to_vmem [thread:$0]  %s244, 512, %s246, %s235, 128, 128, 8
        $region36: #{tpu_custom_call.1} parent=27 // pred_fallthru
          _
      $region28: #{tpu_custom_call.1} parent=5 // pred_fallthru
        _
      %p252 = scmp.le.s32.totalorder 1, %s21
      %p253 = scmp.lt.s32.totalorder %s21, 3
      %p254 = pnand %p252, %p253
      %p255 = pneg %p254
      // Predicated region
      $region37: #{tpu_custom_call.1} parent=5 // pred_check
        _
      $region38: #{tpu_custom_call.1} parent=5 // pred_check_branch
        %257 = sbr.rel (%p254) target = $region40
      $region39: #{tpu_custom_call.1} parent=5 // pred_region
        %s258 = ssub.s32 %s21, 1
        %s259 = sand.u32 %s34, 1
        %s260 = scalar_lea.sflag [#allocation3], %s259
        %s261 = sand.u32 %s34, 1
        %s262 = smul.addr %s261, 16
        %s263 = scalar_lea.vmem [#allocation2], %s262
        // Predicated region
        $region41: #{tpu_custom_call.1} parent=39 // pred_check
          %p264 = pneg %p47
        $region42: #{tpu_custom_call.1} parent=39 // pred_check_branch
          %266 = sbr.rel (%p264) target = $region44
        $region43: #{tpu_custom_call.1} parent=39 // pred_region
          %267 = dma.done %s260, 256
        $region44: #{tpu_custom_call.1} parent=39 // pred_fallthru
          _
        %s268 = sand.u32 %s26, 1
        %s269 = scalar_lea.sflag [#allocation6], %s268
        %s270 = sand.u32 %s60, 1
        %s271 = smul.addr %s270, 32
        %s272 = scalar_lea.vmem [#allocation5], %s271
        // Predicated region
        $region45: #{tpu_custom_call.1} parent=39 // pred_check
          %p273 = pneg %p73
        $region46: #{tpu_custom_call.1} parent=39 // pred_check_branch
          %275 = sbr.rel (%p273) target = $region48
        $region47: #{tpu_custom_call.1} parent=39 // pred_region
          %276 = dma.done %s269, 512
        $region48: #{tpu_custom_call.1} parent=39 // pred_fallthru
          _
        // Predicated region
        $region49: #{tpu_custom_call.1} parent=39 // pred_check
          %p277 = pneg %p94
        $region50: #{tpu_custom_call.1} parent=39 // pred_check_branch
          %279 = sbr.rel (%p277) target = $region52
        $region51: #{tpu_custom_call.1} parent=39 // pred_region
          %280 = dma.done [#allocation6], 256
        $region52: #{tpu_custom_call.1} parent=39 // pred_fallthru
          _
        // Predicated region
        $region53: #{tpu_custom_call.1} parent=39 // pred_check
          %p281 = pneg %p115
        $region54: #{tpu_custom_call.1} parent=39 // pred_check_branch
          %283 = sbr.rel (%p281) target = $region56
        $region55: #{tpu_custom_call.1} parent=39 // pred_region
          %284 = dma.done [#allocation9], 256
        $region56: #{tpu_custom_call.1} parent=39 // pred_fallthru
          _
        %s285 = sand.u32 %s34, 1
        %s286 = scalar_lea.sflag [#allocation3], %s285
        %s287 = sand.u32 %s34, 1
        %s288 = smul.addr %s287, 16
        %s289 = scalar_lea.vmem [#allocation2], %s288
        %p290 = pneg %p47
        %p291 = pneg %p44
        %s292 = sand.u32 %s26, 1
        %s293 = scalar_lea.sflag [#allocation6], %s292
        %s294 = sand.u32 %s60, 1
        %s295 = smul.addr %s294, 32
        %s296 = scalar_lea.vmem [#allocation5], %s295
        %p297 = pneg %p73
        %p298 = pneg %p70
        %p299 = pneg %p94
        %p300 = pneg %p91
        %p301 = pneg %p115
        %p302 = pneg %p112
        %p303 = pneg %p136
        %p304 = pneg %p133
        %p305 = pneg %p162
        %p306 = pneg %p159
        %s307 = sand.u32 %s149, 1
        %s308 = scalar_lea.sflag [#allocation4], %s307
        %s309 = sand.u32 %s149, 1
        %s310 = smul.addr %s309, 32
        %s311 = scalar_lea.vmem [#allocation10], %s310
        %s312 = smul.u32 4, %s26
        %s313 = smul.u32 4, %s26
        %s314 = smul.u32 4, %s26
        %v316 = vld [vmem:[%s263] sm:$0xf]
        %v317 = vld [vmem:[%s263 + $0x4] sm:$0xf]
        %v318 = vld [vmem:[%s263 + $0x8] sm:$0xf]
        %v319 = vld [vmem:[%s263 + $0xc] sm:$0xf]
        %v320 = vld [vmem:[#allocation7] sm:$0xf]
        %v321 = vld [vmem:[#allocation7 + $0x4] sm:$0xf]
        %v322 = vld [vmem:[#allocation7 + $0x8] sm:$0xf]
        %v323 = vld [vmem:[#allocation7 + $0xc] sm:$0xf]
        %v328 = vunpack.c.l.b16 %v316
        %v329 = vunpack.c.l.b16 %v317
        %v330 = vunpack.c.l.b16 %v318
        %v331 = vunpack.c.l.b16 %v319
        %v332 = vpack.c.b16 %v329, %v328
        %v333 = vpack.c.b16 %v331, %v330
        %v338 = vunpack.c.l.b16 %v320
        %v339 = vunpack.c.l.b16 %v321
        %v340 = vunpack.c.l.b16 %v322
        %v341 = vunpack.c.l.b16 %v323
        %v342 = vpack.c.b16 %v339, %v338
        %v343 = vpack.c.b16 %v341, %v340
        %vm346 = vcmask 261120
        %v348 = vsel %vm346, %v332, 0
        %v351 = vsel %vm346, %v333, 0
        %353 = vmatprep.subr.bf16.mxu0 0
        %354 = vmatpush1.bf16.msra.mxu0 0
        %355 = vmatprep.subr.bf16.mxu0 0
        %356 = vmatpush1.bf16.msra.mxu0 0
        %357 = vmatprep.subr.bf16.mxu0 0
        %358 = vmatpush1.bf16.msra.mxu0 0
        %359 = vmatprep.subr.bf16.mxu0 0
        %360 = vmatpush1.bf16.msra.mxu0 0
        %361 = vmatprep.subr.bf16.mxu0 0
        %362 = vmatpush1.bf16.msra.mxu0 0
        %363 = vmatprep.subr.bf16.mxu0 0
        %364 = vmatpush1.bf16.msra.mxu0 0
        %365 = vmatprep.subr.bf16.mxu0 0
        %366 = vmatpush1.bf16.msra.mxu0 %v343
        %367 = vmatprep.subr.bf16.mxu0 0
        %368 = vmatpush1.bf16.msra.mxu0 %v342
        %369 = vmatprep.subr.bf16.mxu0 0
        %370 = vmatpush2.bf16.msra.mxu0 0
        %371 = vmatprep.subr.bf16.mxu0 0
        %372 = vmatpush2.bf16.msra.mxu0 0
        %373 = vmatprep.subr.bf16.mxu0 0
        %374 = vmatpush2.bf16.msra.mxu0 0
        %375 = vmatprep.subr.bf16.mxu0 0
        %376 = vmatpush2.bf16.msra.mxu0 0
        %377 = vmatprep.subr.bf16.mxu0 0
        %378 = vmatpush2.bf16.msra.mxu0 0
        %379 = vmatprep.subr.bf16.mxu0 0
        %380 = vmatpush2.bf16.msra.mxu0 0
        %381 = vmatprep.subr.bf16.mxu0 0
        %382 = vmatpush2.bf16.msra.mxu0 0
        %383 = vmatprep.subr.bf16.mxu0 0
        %384 = vmatpush2.bf16.msra.mxu0 0
        %385 = vmatprep.mubr.bf16.mxu0 0
        %386 = vmatmul.mubr.bf16.gmra.mxu0 %v348
        %v387 = vpop.f32.mrf.mxu0
        %v388 = vadd.f32 0.0, %v387
        %v389 = vpop.f32.mrf.mxu0
        %v390 = vpop.f32.mrf.mxu0
        %v391 = vadd.f32 0.0, %v390
        %v392 = vpop.f32.mrf.mxu0
        %393 = vmatprep.mubr.bf16.mxu0 0
        %394 = vmatmul.mubr.bf16.gmra.mxu0 %v351
        %v395 = vpop.f32.mrf.mxu0
        %v396 = vadd.f32 0.0, %v395
        %v397 = vpop.f32.mrf.mxu0
        %v398 = vpop.f32.mrf.mxu0
        %v399 = vadd.f32 0.0, %v398
        %v400 = vpop.f32.mrf.mxu0
        %401 = vdwg.mxu0
        %v402 = vld [vmem:[%s272] sm:$0xff]
        %v403 = vld [vmem:[%s272 + $0x8] sm:$0xff]
        %v404 = vld [vmem:[%s272 + $0x10] sm:$0xff]
        %v405 = vld [vmem:[%s272 + $0x18] sm:$0xff]
        %v406 = vpack.c.bf16 %v388, %v388
        %v407 = vpack.c.bf16 %v391, %v391
        %v408 = vpack.c.bf16 %v396, %v396
        %v409 = vpack.c.bf16 %v399, %v399
        %411 = vrot.lane.b32.xlu0 %v406, 96
        %v412 = vpop.permute.xlu0 %411
        %vm413 = vcmask 64512
        %v415 = vsel %vm413, %v406, 0
        %v418 = vsel %vm413, %v412, 0
        %420 = vmatprep.subr.bf16.mxu0 0
        %421 = vmatpush1.bf16.xpose.msra.mxu0 0
        %422 = vmatprep.subr.bf16.mxu0 0
        %423 = vmatpush1.bf16.xpose.msra.mxu0 0
        %424 = vmatprep.subr.bf16.mxu0 0
        %425 = vmatpush1.bf16.xpose.msra.mxu0 0
        %426 = vmatprep.subr.bf16.mxu0 0
        %427 = vmatpush1.bf16.xpose.msra.mxu0 0
        %428 = vmatprep.subr.bf16.mxu0 0
        %429 = vmatpush1.bf16.xpose.msra.mxu0 0
        %430 = vmatprep.subr.bf16.mxu0 0
        %431 = vmatpush1.bf16.xpose.msra.mxu0 0
        %432 = vmatprep.subr.bf16.mxu0 0
        %433 = vmatpush1.bf16.xpose.msra.mxu0 0
        %434 = vmatprep.subr.bf16.mxu0 0
        %435 = vmatpush1.bf16.xpose.msra.mxu0 %v418
        %436 = vmatprep.subr.bf16.mxu0 0
        %437 = vmatpush2.bf16.xpose.msra.mxu0 0
        %438 = vmatprep.subr.bf16.mxu0 0
        %439 = vmatpush2.bf16.xpose.msra.mxu0 0
        %440 = vmatprep.subr.bf16.mxu0 0
        %441 = vmatpush2.bf16.xpose.msra.mxu0 0
        %442 = vmatprep.subr.bf16.mxu0 0
        %443 = vmatpush2.bf16.xpose.msra.mxu0 0
        %444 = vmatprep.subr.bf16.mxu0 0
        %445 = vmatpush2.bf16.xpose.msra.mxu0 0
        %446 = vmatprep.subr.bf16.mxu0 0
        %447 = vmatpush2.bf16.xpose.msra.mxu0 0
        %448 = vmatprep.subr.bf16.mxu0 0
        %449 = vmatpush2.bf16.xpose.msra.mxu0 0
        %450 = vmatprep.subr.bf16.mxu0 0
        %451 = vmatpush2.bf16.xpose.msra.mxu0 0
        %452 = vmatprep.mubr.bf16.mxu0 0
        %453 = vmatmul.mubr.bf16.gmra.mxu0 %v415
        %v454 = vpop.f32.mrf.mxu0
        %v455 = vadd.f32 %v402, %v454
        %v456 = vpop.f32.mrf.mxu0
        %v457 = vpop.f32.mrf.mxu0
        %v458 = vpop.f32.mrf.mxu0
        %459 = vdwg.mxu0
        %461 = vrot.lane.b32.xlu0 %v407, 96
        %v462 = vpop.permute.xlu0 %461
        %v464 = vsel %vm413, %v407, 0
        %v467 = vsel %vm413, %v462, 0
        %469 = vmatprep.subr.bf16.mxu0 0
        %470 = vmatpush1.bf16.xpose.msra.mxu0 0
        %471 = vmatprep.subr.bf16.mxu0 0
        %472 = vmatpush1.bf16.xpose.msra.mxu0 0
        %473 = vmatprep.subr.bf16.mxu0 0
        %474 = vmatpush1.bf16.xpose.msra.mxu0 0
        %475 = vmatprep.subr.bf16.mxu0 0
        %476 = vmatpush1.bf16.xpose.msra.mxu0 0
        %477 = vmatprep.subr.bf16.mxu0 0
        %478 = vmatpush1.bf16.xpose.msra.mxu0 0
        %479 = vmatprep.subr.bf16.mxu0 0
        %480 = vmatpush1.bf16.xpose.msra.mxu0 0
        %481 = vmatprep.subr.bf16.mxu0 0
        %482 = vmatpush1.bf16.xpose.msra.mxu0 0
        %483 = vmatprep.subr.bf16.mxu0 0
        %484 = vmatpush1.bf16.xpose.msra.mxu0 %v467
        %485 = vmatprep.subr.bf16.mxu0 0
        %486 = vmatpush2.bf16.xpose.msra.mxu0 0
        %487 = vmatprep.subr.bf16.mxu0 0
        %488 = vmatpush2.bf16.xpose.msra.mxu0 0
        %489 = vmatprep.subr.bf16.mxu0 0
        %490 = vmatpush2.bf16.xpose.msra.mxu0 0
        %491 = vmatprep.subr.bf16.mxu0 0
        %492 = vmatpush2.bf16.xpose.msra.mxu0 0
        %493 = vmatprep.subr.bf16.mxu0 0
        %494 = vmatpush2.bf16.xpose.msra.mxu0 0
        %495 = vmatprep.subr.bf16.mxu0 0
        %496 = vmatpush2.bf16.xpose.msra.mxu0 0
        %497 = vmatprep.subr.bf16.mxu0 0
        %498 = vmatpush2.bf16.xpose.msra.mxu0 0
        %499 = vmatprep.subr.bf16.mxu0 0
        %500 = vmatpush2.bf16.xpose.msra.mxu0 0
        %501 = vmatprep.mubr.bf16.mxu0 0
        %502 = vmatmul.mubr.bf16.gmra.mxu0 %v464
        %v503 = vpop.f32.mrf.mxu0
        %v504 = vadd.f32 %v403, %v503
        %v505 = vpop.f32.mrf.mxu0
        %v506 = vpop.f32.mrf.mxu0
        %v507 = vpop.f32.mrf.mxu0
        %508 = vdwg.mxu0
        %510 = vrot.lane.b32.xlu0 %v408, 96
        %v511 = vpop.permute.xlu0 %510
        %v513 = vsel %vm413, %v408, 0
        %v516 = vsel %vm413, %v511, 0
        %518 = vmatprep.subr.bf16.mxu0 0
        %519 = vmatpush1.bf16.xpose.msra.mxu0 0
        %520 = vmatprep.subr.bf16.mxu0 0
        %521 = vmatpush1.bf16.xpose.msra.mxu0 0
        %522 = vmatprep.subr.bf16.mxu0 0
        %523 = vmatpush1.bf16.xpose.msra.mxu0 0
        %524 = vmatprep.subr.bf16.mxu0 0
        %525 = vmatpush1.bf16.xpose.msra.mxu0 0
        %526 = vmatprep.subr.bf16.mxu0 0
        %527 = vmatpush1.bf16.xpose.msra.mxu0 0
        %528 = vmatprep.subr.bf16.mxu0 0
        %529 = vmatpush1.bf16.xpose.msra.mxu0 0
        %530 = vmatprep.subr.bf16.mxu0 0
        %531 = vmatpush1.bf16.xpose.msra.mxu0 0
        %532 = vmatprep.subr.bf16.mxu0 0
        %533 = vmatpush1.bf16.xpose.msra.mxu0 %v516
        %534 = vmatprep.subr.bf16.mxu0 0
        %535 = vmatpush2.bf16.xpose.msra.mxu0 0
        %536 = vmatprep.subr.bf16.mxu0 0
        %537 = vmatpush2.bf16.xpose.msra.mxu0 0
        %538 = vmatprep.subr.bf16.mxu0 0
        %539 = vmatpush2.bf16.xpose.msra.mxu0 0
        %540 = vmatprep.subr.bf16.mxu0 0
        %541 = vmatpush2.bf16.xpose.msra.mxu0 0
        %542 = vmatprep.subr.bf16.mxu0 0
        %543 = vmatpush2.bf16.xpose.msra.mxu0 0
        %544 = vmatprep.subr.bf16.mxu0 0
        %545 = vmatpush2.bf16.xpose.msra.mxu0 0
        %546 = vmatprep.subr.bf16.mxu0 0
        %547 = vmatpush2.bf16.xpose.msra.mxu0 0
        %548 = vmatprep.subr.bf16.mxu0 0
        %549 = vmatpush2.bf16.xpose.msra.mxu0 0
        %550 = vmatprep.mubr.bf16.mxu0 0
        %551 = vmatmul.mubr.bf16.gmra.mxu0 %v513
        %v552 = vpop.f32.mrf.mxu0
        %v553 = vadd.f32 %v404, %v552
        %v554 = vpop.f32.mrf.mxu0
        %v555 = vpop.f32.mrf.mxu0
        %v556 = vpop.f32.mrf.mxu0
        %557 = vdwg.mxu0
        %559 = vrot.lane.b32.xlu0 %v409, 96
        %v560 = vpop.permute.xlu0 %559
        %v562 = vsel %vm413, %v409, 0
        %v565 = vsel %vm413, %v560, 0
        %567 = vmatprep.subr.bf16.mxu0 0
        %568 = vmatpush1.bf16.xpose.msra.mxu0 0
        %569 = vmatprep.subr.bf16.mxu0 0
        %570 = vmatpush1.bf16.xpose.msra.mxu0 0
        %571 = vmatprep.subr.bf16.mxu0 0
        %572 = vmatpush1.bf16.xpose.msra.mxu0 0
        %573 = vmatprep.subr.bf16.mxu0 0
        %574 = vmatpush1.bf16.xpose.msra.mxu0 0
        %575 = vmatprep.subr.bf16.mxu0 0
        %576 = vmatpush1.bf16.xpose.msra.mxu0 0
        %577 = vmatprep.subr.bf16.mxu0 0
        %578 = vmatpush1.bf16.xpose.msra.mxu0 0
        %579 = vmatprep.subr.bf16.mxu0 0
        %580 = vmatpush1.bf16.xpose.msra.mxu0 0
        %581 = vmatprep.subr.bf16.mxu0 0
        %582 = vmatpush1.bf16.xpose.msra.mxu0 %v565
        %583 = vmatprep.subr.bf16.mxu0 0
        %584 = vmatpush2.bf16.xpose.msra.mxu0 0
        %585 = vmatprep.subr.bf16.mxu0 0
        %586 = vmatpush2.bf16.xpose.msra.mxu0 0
        %587 = vmatprep.subr.bf16.mxu0 0
        %588 = vmatpush2.bf16.xpose.msra.mxu0 0
        %589 = vmatprep.subr.bf16.mxu0 0
        %590 = vmatpush2.bf16.xpose.msra.mxu0 0
        %591 = vmatprep.subr.bf16.mxu0 0
        %592 = vmatpush2.bf16.xpose.msra.mxu0 0
        %593 = vmatprep.subr.bf16.mxu0 0
        %594 = vmatpush2.bf16.xpose.msra.mxu0 0
        %595 = vmatprep.subr.bf16.mxu0 0
        %596 = vmatpush2.bf16.xpose.msra.mxu0 0
        %597 = vmatprep.subr.bf16.mxu0 0
        %598 = vmatpush2.bf16.xpose.msra.mxu0 0
        %599 = vmatprep.mubr.bf16.mxu0 0
        %600 = vmatmul.mubr.bf16.gmra.mxu0 %v562
        %v601 = vpop.f32.mrf.mxu0
        %v602 = vadd.f32 %v405, %v601
        %v603 = vpop.f32.mrf.mxu0
        %v604 = vpop.f32.mrf.mxu0
        %v605 = vpop.f32.mrf.mxu0
        %606 = vdwg.mxu0
        %v607 = vsel %vm413, %v455, -inf
        %608 = vmax.xlane.f32.xlu0 %v607
        %v609 = vpop.xlane.xlu0 %608
        %v610 = vsel %vm413, %v504, -inf
        %611 = vmax.xlane.f32.xlu0 %v610
        %v612 = vpop.xlane.xlu0 %611
        %v613 = vsel %vm413, %v553, -inf
        %614 = vmax.xlane.f32.xlu0 %v613
        %v615 = vpop.xlane.xlu0 %614
        %v616 = vsel %vm413, %v602, -inf
        %617 = vmax.xlane.f32.xlu0 %v616
        %v618 = vpop.xlane.xlu0 %617
        %v619 = vsub.f32 %v455, %v609
        %v620 = vsub.f32 %v504, %v612
        %v621 = vsub.f32 %v553, %v615
        %v622 = vsub.f32 %v602, %v618
        %v623 = vmul.f32 %v619, 1.442695
        %v624 = vpow.pop %v623
        %v625 = vmul.f32 %v620, 1.442695
        %v626 = vpow.pop %v625
        %v627 = vmul.f32 %v621, 1.442695
        %v628 = vpow.pop %v627
        %v629 = vmul.f32 %v622, 1.442695
        %v630 = vpow.pop %v629
        %v631 = vsel %vm413, %v624, 0.0
        %632 = vadd.xlane.f32.xlu0 %v631
        %v633 = vpop.xlane.xlu0 %632
        %v634 = vsel %vm413, %v626, 0.0
        %635 = vadd.xlane.f32.xlu0 %v634
        %v636 = vpop.xlane.xlu0 %635
        %v637 = vsel %vm413, %v628, 0.0
        %638 = vadd.xlane.f32.xlu0 %v637
        %v639 = vpop.xlane.xlu0 %638
        %v640 = vsel %vm413, %v630, 0.0
        %641 = vadd.xlane.f32.xlu0 %v640
        %v642 = vpop.xlane.xlu0 %641
        %v643 = vrcp.pop %v633
        %v644 = vrcp.pop %v636
        %v645 = vrcp.pop %v639
        %v646 = vrcp.pop %v642
        %v647 = vmul.f32 %v624, %v643
        %v648 = vmul.f32 %v626, %v644
        %v649 = vmul.f32 %v628, %v645
        %v650 = vmul.f32 %v630, %v646
        %v651 = vpack.c.bf16 %v647, %v647
        %v652 = vpack.c.bf16 %v648, %v648
        %v653 = vpack.c.bf16 %v649, %v649
        %v654 = vpack.c.bf16 %v650, %v650
        %655 = vrot.lane.b32.xlu0 %v406, 64
        %v656 = vpop.permute.xlu0 %655
        %v658 = vsel %vm413, %v651, 0
        %vm660 = vcmask 1043456
        %v662 = vsel %vm660, %v656, 0
        %664 = vmatprep.subr.bf16.mxu0 0
        %665 = vmatpush1.bf16.msra.mxu0 0
        %666 = vmatprep.subr.bf16.mxu0 0
        %667 = vmatpush1.bf16.msra.mxu0 0
        %668 = vmatprep.subr.bf16.mxu0 0
        %669 = vmatpush1.bf16.msra.mxu0 0
        %670 = vmatprep.subr.bf16.mxu0 0
        %671 = vmatpush1.bf16.msra.mxu0 0
        %672 = vmatprep.subr.bf16.mxu0 0
        %673 = vmatpush1.bf16.msra.mxu0 0
        %674 = vmatprep.subr.bf16.mxu0 0
        %675 = vmatpush1.bf16.msra.mxu0 0
        %676 = vmatprep.subr.bf16.mxu0 0
        %677 = vmatpush1.bf16.msra.mxu0 0
        %678 = vmatprep.subr.bf16.mxu0 0
        %679 = vmatpush1.bf16.msra.mxu0 %v662
        %680 = vmatprep.subr.bf16.mxu0 0
        %681 = vmatpush2.bf16.msra.mxu0 0
        %682 = vmatprep.subr.bf16.mxu0 0
        %683 = vmatpush2.bf16.msra.mxu0 0
        %684 = vmatprep.subr.bf16.mxu0 0
        %685 = vmatpush2.bf16.msra.mxu0 0
        %686 = vmatprep.subr.bf16.mxu0 0
        %687 = vmatpush2.bf16.msra.mxu0 0
        %688 = vmatprep.subr.bf16.mxu0 0
        %689 = vmatpush2.bf16.msra.mxu0 0
        %690 = vmatprep.subr.bf16.mxu0 0
        %691 = vmatpush2.bf16.msra.mxu0 0
        %692 = vmatprep.subr.bf16.mxu0 0
        %693 = vmatpush2.bf16.msra.mxu0 0
        %694 = vmatprep.subr.bf16.mxu0 0
        %695 = vmatpush2.bf16.msra.mxu0 0
        %696 = vmatprep.mubr.bf16.mxu0 0
        %697 = vmatmul.mubr.bf16.gmra.mxu0 %v658
        %v698 = vpop.f32.mrf.mxu0
        %v699 = vadd.f32 0.0, %v698
        %v700 = vpop.f32.mrf.mxu0
        %v701 = vpop.f32.mrf.mxu0
        %v702 = vpop.f32.mrf.mxu0
        %703 = vdwg.mxu0
        %704 = vrot.lane.b32.xlu0 %v407, 64
        %v705 = vpop.permute.xlu0 %704
        %v707 = vsel %vm413, %v652, 0
        %v710 = vsel %vm660, %v705, 0
        %712 = vmatprep.subr.bf16.mxu0 0
        %713 = vmatpush1.bf16.msra.mxu0 0
        %714 = vmatprep.subr.bf16.mxu0 0
        %715 = vmatpush1.bf16.msra.mxu0 0
        %716 = vmatprep.subr.bf16.mxu0 0
        %717 = vmatpush1.bf16.msra.mxu0 0
        %718 = vmatprep.subr.bf16.mxu0 0
        %719 = vmatpush1.bf16.msra.mxu0 0
        %720 = vmatprep.subr.bf16.mxu0 0
        %721 = vmatpush1.bf16.msra.mxu0 0
        %722 = vmatprep.subr.bf16.mxu0 0
        %723 = vmatpush1.bf16.msra.mxu0 0
        %724 = vmatprep.subr.bf16.mxu0 0
        %725 = vmatpush1.bf16.msra.mxu0 0
        %726 = vmatprep.subr.bf16.mxu0 0
        %727 = vmatpush1.bf16.msra.mxu0 %v710
        %728 = vmatprep.subr.bf16.mxu0 0
        %729 = vmatpush2.bf16.msra.mxu0 0
        %730 = vmatprep.subr.bf16.mxu0 0
        %731 = vmatpush2.bf16.msra.mxu0 0
        %732 = vmatprep.subr.bf16.mxu0 0
        %733 = vmatpush2.bf16.msra.mxu0 0
        %734 = vmatprep.subr.bf16.mxu0 0
        %735 = vmatpush2.bf16.msra.mxu0 0
        %736 = vmatprep.subr.bf16.mxu0 0
        %737 = vmatpush2.bf16.msra.mxu0 0
        %738 = vmatprep.subr.bf16.mxu0 0
        %739 = vmatpush2.bf16.msra.mxu0 0
        %740 = vmatprep.subr.bf16.mxu0 0
        %741 = vmatpush2.bf16.msra.mxu0 0
        %742 = vmatprep.subr.bf16.mxu0 0
        %743 = vmatpush2.bf16.msra.mxu0 0
        %744 = vmatprep.mubr.bf16.mxu0 0
        %745 = vmatmul.mubr.bf16.gmra.mxu0 %v707
        %v746 = vpop.f32.mrf.mxu0
        %v747 = vadd.f32 0.0, %v746
        %v748 = vpop.f32.mrf.mxu0
        %v749 = vpop.f32.mrf.mxu0
        %v750 = vpop.f32.mrf.mxu0
        %751 = vdwg.mxu0
        %752 = vrot.lane.b32.xlu0 %v408, 64
        %v753 = vpop.permute.xlu0 %752
        %v755 = vsel %vm413, %v653, 0
        %v758 = vsel %vm660, %v753, 0
        %760 = vmatprep.subr.bf16.mxu0 0
        %761 = vmatpush1.bf16.msra.mxu0 0
        %762 = vmatprep.subr.bf16.mxu0 0
        %763 = vmatpush1.bf16.msra.mxu0 0
        %764 = vmatprep.subr.bf16.mxu0 0
        %765 = vmatpush1.bf16.msra.mxu0 0
        %766 = vmatprep.subr.bf16.mxu0 0
        %767 = vmatpush1.bf16.msra.mxu0 0
        %768 = vmatprep.subr.bf16.mxu0 0
        %769 = vmatpush1.bf16.msra.mxu0 0
        %770 = vmatprep.subr.bf16.mxu0 0
        %771 = vmatpush1.bf16.msra.mxu0 0
        %772 = vmatprep.subr.bf16.mxu0 0
        %773 = vmatpush1.bf16.msra.mxu0 0
        %774 = vmatprep.subr.bf16.mxu0 0
        %775 = vmatpush1.bf16.msra.mxu0 %v758
        %776 = vmatprep.subr.bf16.mxu0 0
        %777 = vmatpush2.bf16.msra.mxu0 0
        %778 = vmatprep.subr.bf16.mxu0 0
        %779 = vmatpush2.bf16.msra.mxu0 0
        %780 = vmatprep.subr.bf16.mxu0 0
        %781 = vmatpush2.bf16.msra.mxu0 0
        %782 = vmatprep.subr.bf16.mxu0 0
        %783 = vmatpush2.bf16.msra.mxu0 0
        %784 = vmatprep.subr.bf16.mxu0 0
        %785 = vmatpush2.bf16.msra.mxu0 0
        %786 = vmatprep.subr.bf16.mxu0 0
        %787 = vmatpush2.bf16.msra.mxu0 0
        %788 = vmatprep.subr.bf16.mxu0 0
        %789 = vmatpush2.bf16.msra.mxu0 0
        %790 = vmatprep.subr.bf16.mxu0 0
        %791 = vmatpush2.bf16.msra.mxu0 0
        %792 = vmatprep.mubr.bf16.mxu0 0
        %793 = vmatmul.mubr.bf16.gmra.mxu0 %v755
        %v794 = vpop.f32.mrf.mxu0
        %v795 = vadd.f32 0.0, %v794
        %v796 = vpop.f32.mrf.mxu0
        %v797 = vpop.f32.mrf.mxu0
        %v798 = vpop.f32.mrf.mxu0
        %799 = vdwg.mxu0
        %800 = vrot.lane.b32.xlu0 %v409, 64
        %v801 = vpop.permute.xlu0 %800
        %v803 = vsel %vm413, %v654, 0
        %v806 = vsel %vm660, %v801, 0
        %808 = vmatprep.subr.bf16.mxu0 0
        %809 = vmatpush1.bf16.msra.mxu0 0
        %810 = vmatprep.subr.bf16.mxu0 0
        %811 = vmatpush1.bf16.msra.mxu0 0
        %812 = vmatprep.subr.bf16.mxu0 0
        %813 = vmatpush1.bf16.msra.mxu0 0
        %814 = vmatprep.subr.bf16.mxu0 0
        %815 = vmatpush1.bf16.msra.mxu0 0
        %816 = vmatprep.subr.bf16.mxu0 0
        %817 = vmatpush1.bf16.msra.mxu0 0
        %818 = vmatprep.subr.bf16.mxu0 0
        %819 = vmatpush1.bf16.msra.mxu0 0
        %820 = vmatprep.subr.bf16.mxu0 0
        %821 = vmatpush1.bf16.msra.mxu0 0
        %822 = vmatprep.subr.bf16.mxu0 0
        %823 = vmatpush1.bf16.msra.mxu0 %v806
        %824 = vmatprep.subr.bf16.mxu0 0
        %825 = vmatpush2.bf16.msra.mxu0 0
        %826 = vmatprep.subr.bf16.mxu0 0
        %827 = vmatpush2.bf16.msra.mxu0 0
        %828 = vmatprep.subr.bf16.mxu0 0
        %829 = vmatpush2.bf16.msra.mxu0 0
        %830 = vmatprep.subr.bf16.mxu0 0
        %831 = vmatpush2.bf16.msra.mxu0 0
        %832 = vmatprep.subr.bf16.mxu0 0
        %833 = vmatpush2.bf16.msra.mxu0 0
        %834 = vmatprep.subr.bf16.mxu0 0
        %835 = vmatpush2.bf16.msra.mxu0 0
        %836 = vmatprep.subr.bf16.mxu0 0
        %837 = vmatpush2.bf16.msra.mxu0 0
        %838 = vmatprep.subr.bf16.mxu0 0
        %839 = vmatpush2.bf16.msra.mxu0 0
        %840 = vmatprep.mubr.bf16.mxu0 0
        %841 = vmatmul.mubr.bf16.gmra.mxu0 %v803
        %v842 = vpop.f32.mrf.mxu0
        %v843 = vadd.f32 0.0, %v842
        %v844 = vpop.f32.mrf.mxu0
        %v845 = vpop.f32.mrf.mxu0
        %v846 = vpop.f32.mrf.mxu0
        %847 = vdwg.mxu0
        %v848 = vpack.c.bf16 %v747, %v699
        %v849 = vpack.c.bf16 %v843, %v795
        %v850 = vld [vmem:[#allocation8] sm:$0xf]
        %851 = vrot.lane.b32.xlu0 %v406, 120
        %v852 = vpop.permute.xlu0 %851
        %853 = vrot.lane.b32.xlu0 %v406, 88
        %v854 = vpop.permute.xlu0 %853
        %v856 = vsel %vm413, %v852, 0
        %v859 = vsel %vm413, %v854, 0
        %861 = vmatprep.subr.bf16.mxu0 0
        %862 = vmatpush1.bf16.xpose.msra.mxu0 0
        %863 = vmatprep.subr.bf16.mxu0 0
        %864 = vmatpush1.bf16.xpose.msra.mxu0 0
        %865 = vmatprep.subr.bf16.mxu0 0
        %866 = vmatpush1.bf16.xpose.msra.mxu0 0
        %867 = vmatprep.subr.bf16.mxu0 0
        %868 = vmatpush1.bf16.xpose.msra.mxu0 0
        %869 = vmatprep.subr.bf16.mxu0 0
        %870 = vmatpush1.bf16.xpose.msra.mxu0 0
        %871 = vmatprep.subr.bf16.mxu0 0
        %872 = vmatpush1.bf16.xpose.msra.mxu0 0
        %873 = vmatprep.subr.bf16.mxu0 0
        %874 = vmatpush1.bf16.xpose.msra.mxu0 0
        %875 = vmatprep.subr.bf16.mxu0 0
        %876 = vmatpush1.bf16.xpose.msra.mxu0 %v859
        %877 = vmatprep.subr.bf16.mxu0 0
        %878 = vmatpush2.bf16.xpose.msra.mxu0 0
        %879 = vmatprep.subr.bf16.mxu0 0
        %880 = vmatpush2.bf16.xpose.msra.mxu0 0
        %881 = vmatprep.subr.bf16.mxu0 0
        %882 = vmatpush2.bf16.xpose.msra.mxu0 0
        %883 = vmatprep.subr.bf16.mxu0 0
        %884 = vmatpush2.bf16.xpose.msra.mxu0 0
        %885 = vmatprep.subr.bf16.mxu0 0
        %886 = vmatpush2.bf16.xpose.msra.mxu0 0
        %887 = vmatprep.subr.bf16.mxu0 0
        %888 = vmatpush2.bf16.xpose.msra.mxu0 0
        %889 = vmatprep.subr.bf16.mxu0 0
        %890 = vmatpush2.bf16.xpose.msra.mxu0 0
        %891 = vmatprep.subr.bf16.mxu0 0
        %892 = vmatpush2.bf16.xpose.msra.mxu0 0
        %893 = vmatprep.mubr.bf16.mxu0 0
        %894 = vmatmul.mubr.bf16.gmra.mxu0 %v856
        %v895 = vpop.f32.mrf.mxu0
        %v896 = vadd.f32 %v402, %v895
        %v897 = vpop.f32.mrf.mxu0
        %v898 = vpop.f32.mrf.mxu0
        %v899 = vpop.f32.mrf.mxu0
        %900 = vdwg.mxu0
        %901 = vrot.lane.b32.xlu0 %v407, 120
        %v902 = vpop.permute.xlu0 %901
        %903 = vrot.lane.b32.xlu0 %v407, 88
        %v904 = vpop.permute.xlu0 %903
        %v906 = vsel %vm413, %v902, 0
        %v909 = vsel %vm413, %v904, 0
        %911 = vmatprep.subr.bf16.mxu0 0
        %912 = vmatpush1.bf16.xpose.msra.mxu0 0
        %913 = vmatprep.subr.bf16.mxu0 0
        %914 = vmatpush1.bf16.xpose.msra.mxu0 0
        %915 = vmatprep.subr.bf16.mxu0 0
        %916 = vmatpush1.bf16.xpose.msra.mxu0 0
        %917 = vmatprep.subr.bf16.mxu0 0
        %918 = vmatpush1.bf16.xpose.msra.mxu0 0
        %919 = vmatprep.subr.bf16.mxu0 0
        %920 = vmatpush1.bf16.xpose.msra.mxu0 0
        %921 = vmatprep.subr.bf16.mxu0 0
        %922 = vmatpush1.bf16.xpose.msra.mxu0 0
        %923 = vmatprep.subr.bf16.mxu0 0
        %924 = vmatpush1.bf16.xpose.msra.mxu0 0
        %925 = vmatprep.subr.bf16.mxu0 0
        %926 = vmatpush1.bf16.xpose.msra.mxu0 %v909
        %927 = vmatprep.subr.bf16.mxu0 0
        %928 = vmatpush2.bf16.xpose.msra.mxu0 0
        %929 = vmatprep.subr.bf16.mxu0 0
        %930 = vmatpush2.bf16.xpose.msra.mxu0 0
        %931 = vmatprep.subr.bf16.mxu0 0
        %932 = vmatpush2.bf16.xpose.msra.mxu0 0
        %933 = vmatprep.subr.bf16.mxu0 0
        %934 = vmatpush2.bf16.xpose.msra.mxu0 0
        %935 = vmatprep.subr.bf16.mxu0 0
        %936 = vmatpush2.bf16.xpose.msra.mxu0 0
        %937 = vmatprep.subr.bf16.mxu0 0
        %938 = vmatpush2.bf16.xpose.msra.mxu0 0
        %939 = vmatprep.subr.bf16.mxu0 0
        %940 = vmatpush2.bf16.xpose.msra.mxu0 0
        %941 = vmatprep.subr.bf16.mxu0 0
        %942 = vmatpush2.bf16.xpose.msra.mxu0 0
        %943 = vmatprep.mubr.bf16.mxu0 0
        %944 = vmatmul.mubr.bf16.gmra.mxu0 %v906
        %v945 = vpop.f32.mrf.mxu0
        %v946 = vadd.f32 %v403, %v945
        %v947 = vpop.f32.mrf.mxu0
        %v948 = vpop.f32.mrf.mxu0
        %v949 = vpop.f32.mrf.mxu0
        %950 = vdwg.mxu0
        %951 = vrot.lane.b32.xlu0 %v408, 120
        %v952 = vpop.permute.xlu0 %951
        %953 = vrot.lane.b32.xlu0 %v408, 88
        %v954 = vpop.permute.xlu0 %953
        %v956 = vsel %vm413, %v952, 0
        %v959 = vsel %vm413, %v954, 0
        %961 = vmatprep.subr.bf16.mxu0 0
        %962 = vmatpush1.bf16.xpose.msra.mxu0 0
        %963 = vmatprep.subr.bf16.mxu0 0
        %964 = vmatpush1.bf16.xpose.msra.mxu0 0
        %965 = vmatprep.subr.bf16.mxu0 0
        %966 = vmatpush1.bf16.xpose.msra.mxu0 0
        %967 = vmatprep.subr.bf16.mxu0 0
        %968 = vmatpush1.bf16.xpose.msra.mxu0 0
        %969 = vmatprep.subr.bf16.mxu0 0
        %970 = vmatpush1.bf16.xpose.msra.mxu0 0
        %971 = vmatprep.subr.bf16.mxu0 0
        %972 = vmatpush1.bf16.xpose.msra.mxu0 0
        %973 = vmatprep.subr.bf16.mxu0 0
        %974 = vmatpush1.bf16.xpose.msra.mxu0 0
        %975 = vmatprep.subr.bf16.mxu0 0
        %976 = vmatpush1.bf16.xpose.msra.mxu0 %v959
        %977 = vmatprep.subr.bf16.mxu0 0
        %978 = vmatpush2.bf16.xpose.msra.mxu0 0
        %979 = vmatprep.subr.bf16.mxu0 0
        %980 = vmatpush2.bf16.xpose.msra.mxu0 0
        %981 = vmatprep.subr.bf16.mxu0 0
        %982 = vmatpush2.bf16.xpose.msra.mxu0 0
        %983 = vmatprep.subr.bf16.mxu0 0
        %984 = vmatpush2.bf16.xpose.msra.mxu0 0
        %985 = vmatprep.subr.bf16.mxu0 0
        %986 = vmatpush2.bf16.xpose.msra.mxu0 0
        %987 = vmatprep.subr.bf16.mxu0 0
        %988 = vmatpush2.bf16.xpose.msra.mxu0 0
        %989 = vmatprep.subr.bf16.mxu0 0
        %990 = vmatpush2.bf16.xpose.msra.mxu0 0
        %991 = vmatprep.subr.bf16.mxu0 0
        %992 = vmatpush2.bf16.xpose.msra.mxu0 0
        %993 = vmatprep.mubr.bf16.mxu0 0
        %994 = vmatmul.mubr.bf16.gmra.mxu0 %v956
        %v995 = vpop.f32.mrf.mxu0
        %v996 = vadd.f32 %v404, %v995
        %v997 = vpop.f32.mrf.mxu0
        %v998 = vpop.f32.mrf.mxu0
        %v999 = vpop.f32.mrf.mxu0
        %1000 = vdwg.mxu0
        %1001 = vrot.lane.b32.xlu0 %v409, 120
        %v1002 = vpop.permute.xlu0 %1001
        %1003 = vrot.lane.b32.xlu0 %v409, 88
        %v1004 = vpop.permute.xlu0 %1003
        %v1006 = vsel %vm413, %v1002, 0
        %v1009 = vsel %vm413, %v1004, 0
        %1011 = vmatprep.subr.bf16.mxu0 0
        %1012 = vmatpush1.bf16.xpose.msra.mxu0 0
        %1013 = vmatprep.subr.bf16.mxu0 0
        %1014 = vmatpush1.bf16.xpose.msra.mxu0 0
        %1015 = vmatprep.subr.bf16.mxu0 0
        %1016 = vmatpush1.bf16.xpose.msra.mxu0 0
        %1017 = vmatprep.subr.bf16.mxu0 0
        %1018 = vmatpush1.bf16.xpose.msra.mxu0 0
        %1019 = vmatprep.subr.bf16.mxu0 0
        %1020 = vmatpush1.bf16.xpose.msra.mxu0 0
        %1021 = vmatprep.subr.bf16.mxu0 0
        %1022 = vmatpush1.bf16.xpose.msra.mxu0 0
        %1023 = vmatprep.subr.bf16.mxu0 0
        %1024 = vmatpush1.bf16.xpose.msra.mxu0 0
        %1025 = vmatprep.subr.bf16.mxu0 0
        %1026 = vmatpush1.bf16.xpose.msra.mxu0 %v1009
        %1027 = vmatprep.subr.bf16.mxu0 0
        %1028 = vmatpush2.bf16.xpose.msra.mxu0 0
        %1029 = vmatprep.subr.bf16.mxu0 0
        %1030 = vmatpush2.bf16.xpose.msra.mxu0 0
        %1031 = vmatprep.subr.bf16.mxu0 0
        %1032 = vmatpush2.bf16.xpose.msra.mxu0 0
        %1033 = vmatprep.subr.bf16.mxu0 0
        %1034 = vmatpush2.bf16.xpose.msra.mxu0 0
        %1035 = vmatprep.subr.bf16.mxu0 0
        %1036 = vmatpush2.bf16.xpose.msra.mxu0 0
        %1037 = vmatprep.subr.bf16.mxu0 0
        %1038 = vmatpush2.bf16.xpose.msra.mxu0 0
        %1039 = vmatprep.subr.bf16.mxu0 0
        %1040 = vmatpush2.bf16.xpose.msra.mxu0 0
        %1041 = vmatprep.subr.bf16.mxu0 0
        %1042 = vmatpush2.bf16.xpose.msra.mxu0 0
        %1043 = vmatprep.mubr.bf16.mxu0 0
        %1044 = vmatmul.mubr.bf16.gmra.mxu0 %v1006
        %v1045 = vpop.f32.mrf.mxu0
        %v1046 = vadd.f32 %v405, %v1045
        %v1047 = vpop.f32.mrf.mxu0
        %v1048 = vpop.f32.mrf.mxu0
        %v1049 = vpop.f32.mrf.mxu0
        %1050 = vdwg.mxu0
        %v1051 = vsel %vm413, %v896, -inf
        %1052 = vmax.xlane.f32.xlu0 %v1051
        %v1053 = vpop.xlane.xlu0 %1052
        %v1054 = vsel %vm413, %v946, -inf
        %1055 = vmax.xlane.f32.xlu0 %v1054
        %v1056 = vpop.xlane.xlu0 %1055
        %v1057 = vsel %vm413, %v996, -inf
        %1058 = vmax.xlane.f32.xlu0 %v1057
        %v1059 = vpop.xlane.xlu0 %1058
        %v1060 = vsel %vm413, %v1046, -inf
        %1061 = vmax.xlane.f32.xlu0 %v1060
        %v1062 = vpop.xlane.xlu0 %1061
        %v1063 = vsub.f32 %v896, %v1053
        %v1064 = vsub.f32 %v946, %v1056
        %v1065 = vsub.f32 %v996, %v1059
        %v1066 = vsub.f32 %v1046, %v1062
        %v1067 = vmul.f32 %v1063, 1.442695
        %v1068 = vpow.pop %v1067
        %v1069 = vmul.f32 %v1064, 1.442695
        %v1070 = vpow.pop %v1069
        %v1071 = vmul.f32 %v1065, 1.442695
        %v1072 = vpow.pop %v1071
        %v1073 = vmul.f32 %v1066, 1.442695
        %v1074 = vpow.pop %v1073
        %v1075 = vsel %vm413, %v1068, 0.0
        %1076 = vadd.xlane.f32.xlu0 %v1075
        %v1077 = vpop.xlane.xlu0 %1076
        %v1078 = vsel %vm413, %v1070, 0.0
        %1079 = vadd.xlane.f32.xlu0 %v1078
        %v1080 = vpop.xlane.xlu0 %1079
        %v1081 = vsel %vm413, %v1072, 0.0
        %1082 = vadd.xlane.f32.xlu0 %v1081
        %v1083 = vpop.xlane.xlu0 %1082
        %v1084 = vsel %vm413, %v1074, 0.0
        %1085 = vadd.xlane.f32.xlu0 %v1084
        %v1086 = vpop.xlane.xlu0 %1085
        %v1087 = vrcp.pop %v1077
        %v1088 = vrcp.pop %v1080
        %v1089 = vrcp.pop %v1083
        %v1090 = vrcp.pop %v1086
        %v1091 = vmul.f32 %v1068, %v1087
        %v1092 = vmul.f32 %v1070, %v1088
        %v1093 = vmul.f32 %v1072, %v1089
        %v1094 = vmul.f32 %v1074, %v1090
        %v1095 = vpack.c.bf16 %v1091, %v1091
        %v1096 = vpack.c.bf16 %v1092, %v1092
        %v1097 = vpack.c.bf16 %v1093, %v1093
        %v1098 = vpack.c.bf16 %v1094, %v1094
        %1099 = vrot.lane.b32.xlu0 %v406, 56
        %v1100 = vpop.permute.xlu0 %1099
        %v1102 = vsel %vm413, %v1095, 0
        %v1105 = vsel %vm660, %v1100, 0
        %1107 = vmatprep.subr.bf16.mxu0 0
        %1108 = vmatpush1.bf16.msra.mxu0 0
        %1109 = vmatprep.subr.bf16.mxu0 0
        %1110 = vmatpush1.bf16.msra.mxu0 0
        %1111 = vmatprep.subr.bf16.mxu0 0
        %1112 = vmatpush1.bf16.msra.mxu0 0
        %1113 = vmatprep.subr.bf16.mxu0 0
        %1114 = vmatpush1.bf16.msra.mxu0 0
        %1115 = vmatprep.subr.bf16.mxu0 0
        %1116 = vmatpush1.bf16.msra.mxu0 0
        %1117 = vmatprep.subr.bf16.mxu0 0
        %1118 = vmatpush1.bf16.msra.mxu0 0
        %1119 = vmatprep.subr.bf16.mxu0 0
        %1120 = vmatpush1.bf16.msra.mxu0 0
        %1121 = vmatprep.subr.bf16.mxu0 0
        %1122 = vmatpush1.bf16.msra.mxu0 %v1105
        %1123 = vmatprep.subr.bf16.mxu0 0
        %1124 = vmatpush2.bf16.msra.mxu0 0
        %1125 = vmatprep.subr.bf16.mxu0 0
        %1126 = vmatpush2.bf16.msra.mxu0 0
        %1127 = vmatprep.subr.bf16.mxu0 0
        %1128 = vmatpush2.bf16.msra.mxu0 0
        %1129 = vmatprep.subr.bf16.mxu0 0
        %1130 = vmatpush2.bf16.msra.mxu0 0
        %1131 = vmatprep.subr.bf16.mxu0 0
        %1132 = vmatpush2.bf16.msra.mxu0 0
        %1133 = vmatprep.subr.bf16.mxu0 0
        %1134 = vmatpush2.bf16.msra.mxu0 0
        %1135 = vmatprep.subr.bf16.mxu0 0
        %1136 = vmatpush2.bf16.msra.mxu0 0
        %1137 = vmatprep.subr.bf16.mxu0 0
        %1138 = vmatpush2.bf16.msra.mxu0 0
        %1139 = vmatprep.mubr.bf16.mxu0 0
        %1140 = vmatmul.mubr.bf16.gmra.mxu0 %v1102
        %v1141 = vpop.f32.mrf.mxu0
        %v1142 = vadd.f32 0.0, %v1141
        %v1143 = vpop.f32.mrf.mxu0
        %v1144 = vpop.f32.mrf.mxu0
        %v1145 = vpop.f32.mrf.mxu0
        %1146 = vdwg.mxu0
        %1147 = vrot.lane.b32.xlu0 %v407, 56
        %v1148 = vpop.permute.xlu0 %1147
        %v1150 = vsel %vm413, %v1096, 0
        %v1153 = vsel %vm660, %v1148, 0
        %1155 = vmatprep.subr.bf16.mxu0 0
        %1156 = vmatpush1.bf16.msra.mxu0 0
        %1157 = vmatprep.subr.bf16.mxu0 0
        %1158 = vmatpush1.bf16.msra.mxu0 0
        %1159 = vmatprep.subr.bf16.mxu0 0
        %1160 = vmatpush1.bf16.msra.mxu0 0
        %1161 = vmatprep.subr.bf16.mxu0 0
        %1162 = vmatpush1.bf16.msra.mxu0 0
        %1163 = vmatprep.subr.bf16.mxu0 0
        %1164 = vmatpush1.bf16.msra.mxu0 0
        %1165 = vmatprep.subr.bf16.mxu0 0
        %1166 = vmatpush1.bf16.msra.mxu0 0
        %1167 = vmatprep.subr.bf16.mxu0 0
        %1168 = vmatpush1.bf16.msra.mxu0 0
        %1169 = vmatprep.subr.bf16.mxu0 0
        %1170 = vmatpush1.bf16.msra.mxu0 %v1153
        %1171 = vmatprep.subr.bf16.mxu0 0
        %1172 = vmatpush2.bf16.msra.mxu0 0
        %1173 = vmatprep.subr.bf16.mxu0 0
        %1174 = vmatpush2.bf16.msra.mxu0 0
        %1175 = vmatprep.subr.bf16.mxu0 0
        %1176 = vmatpush2.bf16.msra.mxu0 0
        %1177 = vmatprep.subr.bf16.mxu0 0
        %1178 = vmatpush2.bf16.msra.mxu0 0
        %1179 = vmatprep.subr.bf16.mxu0 0
        %1180 = vmatpush2.bf16.msra.mxu0 0
        %1181 = vmatprep.subr.bf16.mxu0 0
        %1182 = vmatpush2.bf16.msra.mxu0 0
        %1183 = vmatprep.subr.bf16.mxu0 0
        %1184 = vmatpush2.bf16.msra.mxu0 0
        %1185 = vmatprep.subr.bf16.mxu0 0
        %1186 = vmatpush2.bf16.msra.mxu0 0
        %1187 = vmatprep.mubr.bf16.mxu0 0
        %1188 = vmatmul.mubr.bf16.gmra.mxu0 %v1150
        %v1189 = vpop.f32.mrf.mxu0
        %v1190 = vadd.f32 0.0, %v1189
        %v1191 = vpop.f32.mrf.mxu0
        %v1192 = vpop.f32.mrf.mxu0
        %v1193 = vpop.f32.mrf.mxu0
        %1194 = vdwg.mxu0
        %1195 = vrot.lane.b32.xlu0 %v408, 56
        %v1196 = vpop.permute.xlu0 %1195
        %v1198 = vsel %vm413, %v1097, 0
        %v1201 = vsel %vm660, %v1196, 0
        %1203 = vmatprep.subr.bf16.mxu0 0
        %1204 = vmatpush1.bf16.msra.mxu0 0
        %1205 = vmatprep.subr.bf16.mxu0 0
        %1206 = vmatpush1.bf16.msra.mxu0 0
        %1207 = vmatprep.subr.bf16.mxu0 0
        %1208 = vmatpush1.bf16.msra.mxu0 0
        %1209 = vmatprep.subr.bf16.mxu0 0
        %1210 = vmatpush1.bf16.msra.mxu0 0
        %1211 = vmatprep.subr.bf16.mxu0 0
        %1212 = vmatpush1.bf16.msra.mxu0 0
        %1213 = vmatprep.subr.bf16.mxu0 0
        %1214 = vmatpush1.bf16.msra.mxu0 0
        %1215 = vmatprep.subr.bf16.mxu0 0
        %1216 = vmatpush1.bf16.msra.mxu0 0
        %1217 = vmatprep.subr.bf16.mxu0 0
        %1218 = vmatpush1.bf16.msra.mxu0 %v1201
        %1219 = vmatprep.subr.bf16.mxu0 0
        %1220 = vmatpush2.bf16.msra.mxu0 0
        %1221 = vmatprep.subr.bf16.mxu0 0
        %1222 = vmatpush2.bf16.msra.mxu0 0
        %1223 = vmatprep.subr.bf16.mxu0 0
        %1224 = vmatpush2.bf16.msra.mxu0 0
        %1225 = vmatprep.subr.bf16.mxu0 0
        %1226 = vmatpush2.bf16.msra.mxu0 0
        %1227 = vmatprep.subr.bf16.mxu0 0
        %1228 = vmatpush2.bf16.msra.mxu0 0
        %1229 = vmatprep.subr.bf16.mxu0 0
        %1230 = vmatpush2.bf16.msra.mxu0 0
        %1231 = vmatprep.subr.bf16.mxu0 0
        %1232 = vmatpush2.bf16.msra.mxu0 0
        %1233 = vmatprep.subr.bf16.mxu0 0
        %1234 = vmatpush2.bf16.msra.mxu0 0
        %1235 = vmatprep.mubr.bf16.mxu0 0
        %1236 = vmatmul.mubr.bf16.gmra.mxu0 %v1198
        %v1237 = vpop.f32.mrf.mxu0
        %v1238 = vadd.f32 0.0, %v1237
        %v1239 = vpop.f32.mrf.mxu0
        %v1240 = vpop.f32.mrf.mxu0
        %v1241 = vpop.f32.mrf.mxu0
        %1242 = vdwg.mxu0
        %1243 = vrot.lane.b32.xlu0 %v409, 56
        %v1244 = vpop.permute.xlu0 %1243
        %v1246 = vsel %vm413, %v1098, 0
        %v1249 = vsel %vm660, %v1244, 0
        %1251 = vmatprep.subr.bf16.mxu0 0
        %1252 = vmatpush1.bf16.msra.mxu0 0
        %1253 = vmatprep.subr.bf16.mxu0 0
        %1254 = vmatpush1.bf16.msra.mxu0 0
        %1255 = vmatprep.subr.bf16.mxu0 0
        %1256 = vmatpush1.bf16.msra.mxu0 0
        %1257 = vmatprep.subr.bf16.mxu0 0
        %1258 = vmatpush1.bf16.msra.mxu0 0
        %1259 = vmatprep.subr.bf16.mxu0 0
        %1260 = vmatpush1.bf16.msra.mxu0 0
        %1261 = vmatprep.subr.bf16.mxu0 0
        %1262 = vmatpush1.bf16.msra.mxu0 0
        %1263 = vmatprep.subr.bf16.mxu0 0
        %1264 = vmatpush1.bf16.msra.mxu0 0
        %1265 = vmatprep.subr.bf16.mxu0 0
        %1266 = vmatpush1.bf16.msra.mxu0 %v1249
        %1267 = vmatprep.subr.bf16.mxu0 0
        %1268 = vmatpush2.bf16.msra.mxu0 0
        %1269 = vmatprep.subr.bf16.mxu0 0
        %1270 = vmatpush2.bf16.msra.mxu0 0
        %1271 = vmatprep.subr.bf16.mxu0 0
        %1272 = vmatpush2.bf16.msra.mxu0 0
        %1273 = vmatprep.subr.bf16.mxu0 0
        %1274 = vmatpush2.bf16.msra.mxu0 0
        %1275 = vmatprep.subr.bf16.mxu0 0
        %1276 = vmatpush2.bf16.msra.mxu0 0
        %1277 = vmatprep.subr.bf16.mxu0 0
        %1278 = vmatpush2.bf16.msra.mxu0 0
        %1279 = vmatprep.subr.bf16.mxu0 0
        %1280 = vmatpush2.bf16.msra.mxu0 0
        %1281 = vmatprep.subr.bf16.mxu0 0
        %1282 = vmatpush2.bf16.msra.mxu0 0
        %1283 = vmatprep.mubr.bf16.mxu0 0
        %1284 = vmatmul.mubr.bf16.gmra.mxu0 %v1246
        %v1285 = vpop.f32.mrf.mxu0
        %v1286 = vadd.f32 0.0, %v1285
        %v1287 = vpop.f32.mrf.mxu0
        %v1288 = vpop.f32.mrf.mxu0
        %v1289 = vpop.f32.mrf.mxu0
        %1290 = vdwg.mxu0
        %v1291 = vpack.c.bf16 %v1190, %v1142
        %v1292 = vpack.c.bf16 %v1286, %v1238
        %s1293 = scalar_lea.vmem [#allocation8], 4
        %v1294 = vld [vmem:[%s1293] sm:$0xf]
        %v1296 = vsel %vm413, %v1291, 0
        %v1299 = vsel %vm413, %v1292, 0
        %v1302 = vsel %vm660, %v1294, 0
        %1304 = vmatprep.subr.bf16.mxu0 0
        %1305 = vmatpush1.bf16.msra.mxu0 0
        %1306 = vmatprep.subr.bf16.mxu0 0
        %1307 = vmatpush1.bf16.msra.mxu0 0
        %1308 = vmatprep.subr.bf16.mxu0 0
        %1309 = vmatpush1.bf16.msra.mxu0 0
        %1310 = vmatprep.subr.bf16.mxu0 0
        %1311 = vmatpush1.bf16.msra.mxu0 0
        %1312 = vmatprep.subr.bf16.mxu0 0
        %1313 = vmatpush1.bf16.msra.mxu0 0
        %1314 = vmatprep.subr.bf16.mxu0 0
        %1315 = vmatpush1.bf16.msra.mxu0 0
        %1316 = vmatprep.subr.bf16.mxu0 0
        %1317 = vmatpush1.bf16.msra.mxu0 0
        %1318 = vmatprep.subr.bf16.mxu0 0
        %1319 = vmatpush1.bf16.msra.mxu0 %v1302
        %1320 = vmatprep.subr.bf16.mxu0 0
        %1321 = vmatpush2.bf16.msra.mxu0 0
        %1322 = vmatprep.subr.bf16.mxu0 0
        %1323 = vmatpush2.bf16.msra.mxu0 0
        %1324 = vmatprep.subr.bf16.mxu0 0
        %1325 = vmatpush2.bf16.msra.mxu0 0
        %1326 = vmatprep.subr.bf16.mxu0 0
        %1327 = vmatpush2.bf16.msra.mxu0 0
        %1328 = vmatprep.subr.bf16.mxu0 0
        %1329 = vmatpush2.bf16.msra.mxu0 0
        %1330 = vmatprep.subr.bf16.mxu0 0
        %1331 = vmatpush2.bf16.msra.mxu0 0
        %1332 = vmatprep.subr.bf16.mxu0 0
        %1333 = vmatpush2.bf16.msra.mxu0 0
        %1334 = vmatprep.subr.bf16.mxu0 0
        %1335 = vmatpush2.bf16.msra.mxu0 0
        %1336 = vmatprep.mubr.bf16.mxu0 0
        %1337 = vmatmul.mubr.bf16.gmra.mxu0 %v1296
        %v1338 = vpop.f32.mrf.mxu0
        %v1339 = vadd.f32 0.0, %v1338
        %v1340 = vpop.f32.mrf.mxu0
        %v1341 = vpop.f32.mrf.mxu0
        %v1342 = vadd.f32 0.0, %v1341
        %v1343 = vpop.f32.mrf.mxu0
        %1344 = vmatprep.mubr.bf16.mxu0 0
        %1345 = vmatmul.mubr.bf16.gmra.mxu0 %v1299
        %v1346 = vpop.f32.mrf.mxu0
        %v1347 = vadd.f32 0.0, %v1346
        %v1348 = vpop.f32.mrf.mxu0
        %v1349 = vpop.f32.mrf.mxu0
        %v1350 = vadd.f32 0.0, %v1349
        %v1351 = vpop.f32.mrf.mxu0
        %1352 = vdwg.mxu0
        %v1354 = vsel %vm413, %v848, 0
        %v1357 = vsel %vm413, %v849, 0
        %v1360 = vsel %vm660, %v850, 0
        %1362 = vmatprep.subr.bf16.mxu0 0
        %1363 = vmatpush1.bf16.msra.mxu0 0
        %1364 = vmatprep.subr.bf16.mxu0 0
        %1365 = vmatpush1.bf16.msra.mxu0 0
        %1366 = vmatprep.subr.bf16.mxu0 0
        %1367 = vmatpush1.bf16.msra.mxu0 0
        %1368 = vmatprep.subr.bf16.mxu0 0
        %1369 = vmatpush1.bf16.msra.mxu0 0
        %1370 = vmatprep.subr.bf16.mxu0 0
        %1371 = vmatpush1.bf16.msra.mxu0 0
        %1372 = vmatprep.subr.bf16.mxu0 0
        %1373 = vmatpush1.bf16.msra.mxu0 0
        %1374 = vmatprep.subr.bf16.mxu0 0
        %1375 = vmatpush1.bf16.msra.mxu0 0
        %1376 = vmatprep.subr.bf16.mxu0 0
        %1377 = vmatpush1.bf16.msra.mxu0 %v1360
        %1378 = vmatprep.subr.bf16.mxu0 0
        %1379 = vmatpush2.bf16.msra.mxu0 0
        %1380 = vmatprep.subr.bf16.mxu0 0
        %1381 = vmatpush2.bf16.msra.mxu0 0
        %1382 = vmatprep.subr.bf16.mxu0 0
        %1383 = vmatpush2.bf16.msra.mxu0 0
        %1384 = vmatprep.subr.bf16.mxu0 0
        %1385 = vmatpush2.bf16.msra.mxu0 0
        %1386 = vmatprep.subr.bf16.mxu0 0
        %1387 = vmatpush2.bf16.msra.mxu0 0
        %1388 = vmatprep.subr.bf16.mxu0 0
        %1389 = vmatpush2.bf16.msra.mxu0 0
        %1390 = vmatprep.subr.bf16.mxu0 0
        %1391 = vmatpush2.bf16.msra.mxu0 0
        %1392 = vmatprep.subr.bf16.mxu0 0
        %1393 = vmatpush2.bf16.msra.mxu0 0
        %1394 = vmatprep.mubr.bf16.mxu0 0
        %1395 = vmatmul.mubr.bf16.gmra.mxu0 %v1354
        %v1396 = vpop.f32.mrf.mxu0
        %v1397 = vadd.f32 %v1339, %v1396
        %v1398 = vpop.f32.mrf.mxu0
        %v1399 = vpop.f32.mrf.mxu0
        %v1400 = vadd.f32 %v1342, %v1399
        %v1401 = vpop.f32.mrf.mxu0
        %1402 = vmatprep.mubr.bf16.mxu0 0
        %1403 = vmatmul.mubr.bf16.gmra.mxu0 %v1357
        %v1404 = vpop.f32.mrf.mxu0
        %v1405 = vadd.f32 %v1347, %v1404
        %v1406 = vpop.f32.mrf.mxu0
        %v1407 = vpop.f32.mrf.mxu0
        %v1408 = vadd.f32 %v1350, %v1407
        %v1409 = vpop.f32.mrf.mxu0
        %1410 = vdwg.mxu0
        %1411 = vrot.lane.b32.xlu0 %v406, 112
        %v1412 = vpop.permute.xlu0 %1411
        %1413 = vrot.lane.b32.xlu0 %v406, 80
        %v1414 = vpop.permute.xlu0 %1413
        %v1416 = vsel %vm413, %v1412, 0
        %v1419 = vsel %vm413, %v1414, 0
        %1421 = vmatprep.subr.bf16.mxu0 0
        %1422 = vmatpush1.bf16.xpose.msra.mxu0 0
        %1423 = vmatprep.subr.bf16.mxu0 0
        %1424 = vmatpush1.bf16.xpose.msra.mxu0 0
        %1425 = vmatprep.subr.bf16.mxu0 0
        %1426 = vmatpush1.bf16.xpose.msra.mxu0 0
        %1427 = vmatprep.subr.bf16.mxu0 0
        %1428 = vmatpush1.bf16.xpose.msra.mxu0 0
        %1429 = vmatprep.subr.bf16.mxu0 0
        %1430 = vmatpush1.bf16.xpose.msra.mxu0 0
        %1431 = vmatprep.subr.bf16.mxu0 0
        %1432 = vmatpush1.bf16.xpose.msra.mxu0 0
        %1433 = vmatprep.subr.bf16.mxu0 0
        %1434 = vmatpush1.bf16.xpose.msra.mxu0 0
        %1435 = vmatprep.subr.bf16.mxu0 0
        %1436 = vmatpush1.bf16.xpose.msra.mxu0 %v1419
        %1437 = vmatprep.subr.bf16.mxu0 0
        %1438 = vmatpush2.bf16.xpose.msra.mxu0 0
        %1439 = vmatprep.subr.bf16.mxu0 0
        %1440 = vmatpush2.bf16.xpose.msra.mxu0 0
        %1441 = vmatprep.subr.bf16.mxu0 0
        %1442 = vmatpush2.bf16.xpose.msra.mxu0 0
        %1443 = vmatprep.subr.bf16.mxu0 0
        %1444 = vmatpush2.bf16.xpose.msra.mxu0 0
        %1445 = vmatprep.subr.bf16.mxu0 0
        %1446 = vmatpush2.bf16.xpose.msra.mxu0 0
        %1447 = vmatprep.subr.bf16.mxu0 0
        %1448 = vmatpush2.bf16.xpose.msra.mxu0 0
        %1449 = vmatprep.subr.bf16.mxu0 0
        %1450 = vmatpush2.bf16.xpose.msra.mxu0 0
        %1451 = vmatprep.subr.bf16.mxu0 0
        %1452 = vmatpush2.bf16.xpose.msra.mxu0 0
        %1453 = vmatprep.mubr.bf16.mxu0 0
        %1454 = vmatmul.mubr.bf16.gmra.mxu0 %v1416
        %v1455 = vpop.f32.mrf.mxu0
        %v1456 = vadd.f32 %v402, %v1455
        %v1457 = vpop.f32.mrf.mxu0
        %v1458 = vpop.f32.mrf.mxu0
        %v1459 = vpop.f32.mrf.mxu0
        %1460 = vdwg.mxu0
        %1461 = vrot.lane.b32.xlu0 %v407, 112
        %v1462 = vpop.permute.xlu0 %1461
        %1463 = vrot.lane.b32.xlu0 %v407, 80
        %v1464 = vpop.permute.xlu0 %1463
        %v1466 = vsel %vm413, %v1462, 0
        %v1469 = vsel %vm413, %v1464, 0
        %1471 = vmatprep.subr.bf16.mxu0 0
        %1472 = vmatpush1.bf16.xpose.msra.mxu0 0
        %1473 = vmatprep.subr.bf16.mxu0 0
        %1474 = vmatpush1.bf16.xpose.msra.mxu0 0
        %1475 = vmatprep.subr.bf16.mxu0 0
        %1476 = vmatpush1.bf16.xpose.msra.mxu0 0
        %1477 = vmatprep.subr.bf16.mxu0 0
        %1478 = vmatpush1.bf16.xpose.msra.mxu0 0
        %1479 = vmatprep.subr.bf16.mxu0 0
        %1480 = vmatpush1.bf16.xpose.msra.mxu0 0
        %1481 = vmatprep.subr.bf16.mxu0 0
        %1482 = vmatpush1.bf16.xpose.msra.mxu0 0
        %1483 = vmatprep.subr.bf16.mxu0 0
        %1484 = vmatpush1.bf16.xpose.msra.mxu0 0
        %1485 = vmatprep.subr.bf16.mxu0 0
        %1486 = vmatpush1.bf16.xpose.msra.mxu0 %v1469
        %1487 = vmatprep.subr.bf16.mxu0 0
        %1488 = vmatpush2.bf16.xpose.msra.mxu0 0
        %1489 = vmatprep.subr.bf16.mxu0 0
        %1490 = vmatpush2.bf16.xpose.msra.mxu0 0
        %1491 = vmatprep.subr.bf16.mxu0 0
        %1492 = vmatpush2.bf16.xpose.msra.mxu0 0
        %1493 = vmatprep.subr.bf16.mxu0 0
        %1494 = vmatpush2.bf16.xpose.msra.mxu0 0
        %1495 = vmatprep.subr.bf16.mxu0 0
        %1496 = vmatpush2.bf16.xpose.msra.mxu0 0
        %1497 = vmatprep.subr.bf16.mxu0 0
        %1498 = vmatpush2.bf16.xpose.msra.mxu0 0
        %1499 = vmatprep.subr.bf16.mxu0 0
        %1500 = vmatpush2.bf16.xpose.msra.mxu0 0
        %1501 = vmatprep.subr.bf16.mxu0 0
        %1502 = vmatpush2.bf16.xpose.msra.mxu0 0
        %1503 = vmatprep.mubr.bf16.mxu0 0
        %1504 = vmatmul.mubr.bf16.gmra.mxu0 %v1466
        %v1505 = vpop.f32.mrf.mxu0
        %v1506 = vadd.f32 %v403, %v1505
        %v1507 = vpop.f32.mrf.mxu0
        %v1508 = vpop.f32.mrf.mxu0
        %v1509 = vpop.f32.mrf.mxu0
        %1510 = vdwg.mxu0
        %1511 = vrot.lane.b32.xlu0 %v408, 112
        %v1512 = vpop.permute.xlu0 %1511
        %1513 = vrot.lane.b32.xlu0 %v408, 80
        %v1514 = vpop.permute.xlu0 %1513
        %v1516 = vsel %vm413, %v1512, 0
        %v1519 = vsel %vm413, %v1514, 0
        %1521 = vmatprep.subr.bf16.mxu0 0
        %1522 = vmatpush1.bf16.xpose.msra.mxu0 0
        %1523 = vmatprep.subr.bf16.mxu0 0
        %1524 = vmatpush1.bf16.xpose.msra.mxu0 0
        %1525 = vmatprep.subr.bf16.mxu0 0
        %1526 = vmatpush1.bf16.xpose.msra.mxu0 0
        %1527 = vmatprep.subr.bf16.mxu0 0
        %1528 = vmatpush1.bf16.xpose.msra.mxu0 0
        %1529 = vmatprep.subr.bf16.mxu0 0
        %1530 = vmatpush1.bf16.xpose.msra.mxu0 0
        %1531 = vmatprep.subr.bf16.mxu0 0
        %1532 = vmatpush1.bf16.xpose.msra.mxu0 0
        %1533 = vmatprep.subr.bf16.mxu0 0
        %1534 = vmatpush1.bf16.xpose.msra.mxu0 0
        %1535 = vmatprep.subr.bf16.mxu0 0
        %1536 = vmatpush1.bf16.xpose.msra.mxu0 %v1519
        %1537 = vmatprep.subr.bf16.mxu0 0
        %1538 = vmatpush2.bf16.xpose.msra.mxu0 0
        %1539 = vmatprep.subr.bf16.mxu0 0
        %1540 = vmatpush2.bf16.xpose.msra.mxu0 0
        %1541 = vmatprep.subr.bf16.mxu0 0
        %1542 = vmatpush2.bf16.xpose.msra.mxu0 0
        %1543 = vmatprep.subr.bf16.mxu0 0
        %1544 = vmatpush2.bf16.xpose.msra.mxu0 0
        %1545 = vmatprep.subr.bf16.mxu0 0
        %1546 = vmatpush2.bf16.xpose.msra.mxu0 0
        %1547 = vmatprep.subr.bf16.mxu0 0
        %1548 = vmatpush2.bf16.xpose.msra.mxu0 0
        %1549 = vmatprep.subr.bf16.mxu0 0
        %1550 = vmatpush2.bf16.xpose.msra.mxu0 0
        %1551 = vmatprep.subr.bf16.mxu0 0
        %1552 = vmatpush2.bf16.xpose.msra.mxu0 0
        %1553 = vmatprep.mubr.bf16.mxu0 0
        %1554 = vmatmul.mubr.bf16.gmra.mxu0 %v1516
        %v1555 = vpop.f32.mrf.mxu0
        %v1556 = vadd.f32 %v404, %v1555
        %v1557 = vpop.f32.mrf.mxu0
        %v1558 = vpop.f32.mrf.mxu0
        %v1559 = vpop.f32.mrf.mxu0
        %1560 = vdwg.mxu0
        %1561 = vrot.lane.b32.xlu0 %v409, 112
        %v1562 = vpop.permute.xlu0 %1561
        %1563 = vrot.lane.b32.xlu0 %v409, 80
        %v1564 = vpop.permute.xlu0 %1563
        %v1566 = vsel %vm413, %v1562, 0
        %v1569 = vsel %vm413, %v1564, 0
        %1571 = vmatprep.subr.bf16.mxu0 0
        %1572 = vmatpush1.bf16.xpose.msra.mxu0 0
        %1573 = vmatprep.subr.bf16.mxu0 0
        %1574 = vmatpush1.bf16.xpose.msra.mxu0 0
        %1575 = vmatprep.subr.bf16.mxu0 0
        %1576 = vmatpush1.bf16.xpose.msra.mxu0 0
        %1577 = vmatprep.subr.bf16.mxu0 0
        %1578 = vmatpush1.bf16.xpose.msra.mxu0 0
        %1579 = vmatprep.subr.bf16.mxu0 0
        %1580 = vmatpush1.bf16.xpose.msra.mxu0 0
        %1581 = vmatprep.subr.bf16.mxu0 0
        %1582 = vmatpush1.bf16.xpose.msra.mxu0 0
        %1583 = vmatprep.subr.bf16.mxu0 0
        %1584 = vmatpush1.bf16.xpose.msra.mxu0 0
        %1585 = vmatprep.subr.bf16.mxu0 0
        %1586 = vmatpush1.bf16.xpose.msra.mxu0 %v1569
        %1587 = vmatprep.subr.bf16.mxu0 0
        %1588 = vmatpush2.bf16.xpose.msra.mxu0 0
        %1589 = vmatprep.subr.bf16.mxu0 0
        %1590 = vmatpush2.bf16.xpose.msra.mxu0 0
        %1591 = vmatprep.subr.bf16.mxu0 0
        %1592 = vmatpush2.bf16.xpose.msra.mxu0 0
        %1593 = vmatprep.subr.bf16.mxu0 0
        %1594 = vmatpush2.bf16.xpose.msra.mxu0 0
        %1595 = vmatprep.subr.bf16.mxu0 0
        %1596 = vmatpush2.bf16.xpose.msra.mxu0 0
        %1597 = vmatprep.subr.bf16.mxu0 0
        %1598 = vmatpush2.bf16.xpose.msra.mxu0 0
        %1599 = vmatprep.subr.bf16.mxu0 0
        %1600 = vmatpush2.bf16.xpose.msra.mxu0 0
        %1601 = vmatprep.subr.bf16.mxu0 0
        %1602 = vmatpush2.bf16.xpose.msra.mxu0 0
        %1603 = vmatprep.mubr.bf16.mxu0 0
        %1604 = vmatmul.mubr.bf16.gmra.mxu0 %v1566
        %v1605 = vpop.f32.mrf.mxu0
        %v1606 = vadd.f32 %v405, %v1605
        %v1607 = vpop.f32.mrf.mxu0
        %v1608 = vpop.f32.mrf.mxu0
        %v1609 = vpop.f32.mrf.mxu0
        %1610 = vdwg.mxu0
        %v1611 = vsel %vm413, %v1456, -inf
        %1612 = vmax.xlane.f32.xlu0 %v1611
        %v1613 = vpop.xlane.xlu0 %1612
        %v1614 = vsel %vm413, %v1506, -inf
        %1615 = vmax.xlane.f32.xlu0 %v1614
        %v1616 = vpop.xlane.xlu0 %1615
        %v1617 = vsel %vm413, %v1556, -inf
        %1618 = vmax.xlane.f32.xlu0 %v1617
        %v1619 = vpop.xlane.xlu0 %1618
        %v1620 = vsel %vm413, %v1606, -inf
        %1621 = vmax.xlane.f32.xlu0 %v1620
        %v1622 = vpop.xlane.xlu0 %1621
        %v1623 = vsub.f32 %v1456, %v1613
        %v1624 = vsub.f32 %v1506, %v1616
        %v1625 = vsub.f32 %v1556, %v1619
        %v1626 = vsub.f32 %v1606, %v1622
        %v1627 = vmul.f32 %v1623, 1.442695
        %v1628 = vpow.pop %v1627
        %v1629 = vmul.f32 %v1624, 1.442695
        %v1630 = vpow.pop %v1629
        %v1631 = vmul.f32 %v1625, 1.442695
        %v1632 = vpow.pop %v1631
        %v1633 = vmul.f32 %v1626, 1.442695
        %v1634 = vpow.pop %v1633
        %v1635 = vsel %vm413, %v1628, 0.0
        %1636 = vadd.xlane.f32.xlu0 %v1635
        %v1637 = vpop.xlane.xlu0 %1636
        %v1638 = vsel %vm413, %v1630, 0.0
        %1639 = vadd.xlane.f32.xlu0 %v1638
        %v1640 = vpop.xlane.xlu0 %1639
        %v1641 = vsel %vm413, %v1632, 0.0
        %1642 = vadd.xlane.f32.xlu0 %v1641
        %v1643 = vpop.xlane.xlu0 %1642
        %v1644 = vsel %vm413, %v1634, 0.0
        %1645 = vadd.xlane.f32.xlu0 %v1644
        %v1646 = vpop.xlane.xlu0 %1645
        %v1647 = vrcp.pop %v1637
        %v1648 = vrcp.pop %v1640
        %v1649 = vrcp.pop %v1643
        %v1650 = vrcp.pop %v1646
        %v1651 = vmul.f32 %v1628, %v1647
        %v1652 = vmul.f32 %v1630, %v1648
        %v1653 = vmul.f32 %v1632, %v1649
        %v1654 = vmul.f32 %v1634, %v1650
        %v1655 = vpack.c.bf16 %v1651, %v1651
        %v1656 = vpack.c.bf16 %v1652, %v1652
        %v1657 = vpack.c.bf16 %v1653, %v1653
        %v1658 = vpack.c.bf16 %v1654, %v1654
        %1659 = vrot.lane.b32.xlu0 %v406, 48
        %v1660 = vpop.permute.xlu0 %1659
        %v1662 = vsel %vm413, %v1655, 0
        %v1665 = vsel %vm660, %v1660, 0
        %1667 = vmatprep.subr.bf16.mxu0 0
        %1668 = vmatpush1.bf16.msra.mxu0 0
        %1669 = vmatprep.subr.bf16.mxu0 0
        %1670 = vmatpush1.bf16.msra.mxu0 0
        %1671 = vmatprep.subr.bf16.mxu0 0
        %1672 = vmatpush1.bf16.msra.mxu0 0
        %1673 = vmatprep.subr.bf16.mxu0 0
        %1674 = vmatpush1.bf16.msra.mxu0 0
        %1675 = vmatprep.subr.bf16.mxu0 0
        %1676 = vmatpush1.bf16.msra.mxu0 0
        %1677 = vmatprep.subr.bf16.mxu0 0
        %1678 = vmatpush1.bf16.msra.mxu0 0
        %1679 = vmatprep.subr.bf16.mxu0 0
        %1680 = vmatpush1.bf16.msra.mxu0 0
        %1681 = vmatprep.subr.bf16.mxu0 0
        %1682 = vmatpush1.bf16.msra.mxu0 %v1665
        %1683 = vmatprep.subr.bf16.mxu0 0
        %1684 = vmatpush2.bf16.msra.mxu0 0
        %1685 = vmatprep.subr.bf16.mxu0 0
        %1686 = vmatpush2.bf16.msra.mxu0 0
        %1687 = vmatprep.subr.bf16.mxu0 0
        %1688 = vmatpush2.bf16.msra.mxu0 0
        %1689 = vmatprep.subr.bf16.mxu0 0
        %1690 = vmatpush2.bf16.msra.mxu0 0
        %1691 = vmatprep.subr.bf16.mxu0 0
        %1692 = vmatpush2.bf16.msra.mxu0 0
        %1693 = vmatprep.subr.bf16.mxu0 0
        %1694 = vmatpush2.bf16.msra.mxu0 0
        %1695 = vmatprep.subr.bf16.mxu0 0
        %1696 = vmatpush2.bf16.msra.mxu0 0
        %1697 = vmatprep.subr.bf16.mxu0 0
        %1698 = vmatpush2.bf16.msra.mxu0 0
        %1699 = vmatprep.mubr.bf16.mxu0 0
        %1700 = vmatmul.mubr.bf16.gmra.mxu0 %v1662
        %v1701 = vpop.f32.mrf.mxu0
        %v1702 = vadd.f32 0.0, %v1701
        %v1703 = vpop.f32.mrf.mxu0
        %v1704 = vpop.f32.mrf.mxu0
        %v1705 = vpop.f32.mrf.mxu0
        %1706 = vdwg.mxu0
        %1707 = vrot.lane.b32.xlu0 %v407, 48
        %v1708 = vpop.permute.xlu0 %1707
        %v1710 = vsel %vm413, %v1656, 0
        %v1713 = vsel %vm660, %v1708, 0
        %1715 = vmatprep.subr.bf16.mxu0 0
        %1716 = vmatpush1.bf16.msra.mxu0 0
        %1717 = vmatprep.subr.bf16.mxu0 0
        %1718 = vmatpush1.bf16.msra.mxu0 0
        %1719 = vmatprep.subr.bf16.mxu0 0
        %1720 = vmatpush1.bf16.msra.mxu0 0
        %1721 = vmatprep.subr.bf16.mxu0 0
        %1722 = vmatpush1.bf16.msra.mxu0 0
        %1723 = vmatprep.subr.bf16.mxu0 0
        %1724 = vmatpush1.bf16.msra.mxu0 0
        %1725 = vmatprep.subr.bf16.mxu0 0
        %1726 = vmatpush1.bf16.msra.mxu0 0
        %1727 = vmatprep.subr.bf16.mxu0 0
        %1728 = vmatpush1.bf16.msra.mxu0 0
        %1729 = vmatprep.subr.bf16.mxu0 0
        %1730 = vmatpush1.bf16.msra.mxu0 %v1713
        %1731 = vmatprep.subr.bf16.mxu0 0
        %1732 = vmatpush2.bf16.msra.mxu0 0
        %1733 = vmatprep.subr.bf16.mxu0 0
        %1734 = vmatpush2.bf16.msra.mxu0 0
        %1735 = vmatprep.subr.bf16.mxu0 0
        %1736 = vmatpush2.bf16.msra.mxu0 0
        %1737 = vmatprep.subr.bf16.mxu0 0
        %1738 = vmatpush2.bf16.msra.mxu0 0
        %1739 = vmatprep.subr.bf16.mxu0 0
        %1740 = vmatpush2.bf16.msra.mxu0 0
        %1741 = vmatprep.subr.bf16.mxu0 0
        %1742 = vmatpush2.bf16.msra.mxu0 0
        %1743 = vmatprep.subr.bf16.mxu0 0
        %1744 = vmatpush2.bf16.msra.mxu0 0
        %1745 = vmatprep.subr.bf16.mxu0 0
        %1746 = vmatpush2.bf16.msra.mxu0 0
        %1747 = vmatprep.mubr.bf16.mxu0 0
        %1748 = vmatmul.mubr.bf16.gmra.mxu0 %v1710
        %v1749 = vpop.f32.mrf.mxu0
        %v1750 = vadd.f32 0.0, %v1749
        %v1751 = vpop.f32.mrf.mxu0
        %v1752 = vpop.f32.mrf.mxu0
        %v1753 = vpop.f32.mrf.mxu0
        %1754 = vdwg.mxu0
        %1755 = vrot.lane.b32.xlu0 %v408, 48
        %v1756 = vpop.permute.xlu0 %1755
        %v1758 = vsel %vm413, %v1657, 0
        %v1761 = vsel %vm660, %v1756, 0
        %1763 = vmatprep.subr.bf16.mxu0 0
        %1764 = vmatpush1.bf16.msra.mxu0 0
        %1765 = vmatprep.subr.bf16.mxu0 0
        %1766 = vmatpush1.bf16.msra.mxu0 0
        %1767 = vmatprep.subr.bf16.mxu0 0
        %1768 = vmatpush1.bf16.msra.mxu0 0
        %1769 = vmatprep.subr.bf16.mxu0 0
        %1770 = vmatpush1.bf16.msra.mxu0 0
        %1771 = vmatprep.subr.bf16.mxu0 0
        %1772 = vmatpush1.bf16.msra.mxu0 0
        %1773 = vmatprep.subr.bf16.mxu0 0
        %1774 = vmatpush1.bf16.msra.mxu0 0
        %1775 = vmatprep.subr.bf16.mxu0 0
        %1776 = vmatpush1.bf16.msra.mxu0 0
        %1777 = vmatprep.subr.bf16.mxu0 0
        %1778 = vmatpush1.bf16.msra.mxu0 %v1761
        %1779 = vmatprep.subr.bf16.mxu0 0
        %1780 = vmatpush2.bf16.msra.mxu0 0
        %1781 = vmatprep.subr.bf16.mxu0 0
        %1782 = vmatpush2.bf16.msra.mxu0 0
        %1783 = vmatprep.subr.bf16.mxu0 0
        %1784 = vmatpush2.bf16.msra.mxu0 0
        %1785 = vmatprep.subr.bf16.mxu0 0
        %1786 = vmatpush2.bf16.msra.mxu0 0
        %1787 = vmatprep.subr.bf16.mxu0 0
        %1788 = vmatpush2.bf16.msra.mxu0 0
        %1789 = vmatprep.subr.bf16.mxu0 0
        %1790 = vmatpush2.bf16.msra.mxu0 0
        %1791 = vmatprep.subr.bf16.mxu0 0
        %1792 = vmatpush2.bf16.msra.mxu0 0
        %1793 = vmatprep.subr.bf16.mxu0 0
        %1794 = vmatpush2.bf16.msra.mxu0 0
        %1795 = vmatprep.mubr.bf16.mxu0 0
        %1796 = vmatmul.mubr.bf16.gmra.mxu0 %v1758
        %v1797 = vpop.f32.mrf.mxu0
        %v1798 = vadd.f32 0.0, %v1797
        %v1799 = vpop.f32.mrf.mxu0
        %v1800 = vpop.f32.mrf.mxu0
        %v1801 = vpop.f32.mrf.mxu0
        %1802 = vdwg.mxu0
        %1803 = vrot.lane.b32.xlu0 %v409, 48
        %v1804 = vpop.permute.xlu0 %1803
        %v1806 = vsel %vm413, %v1658, 0
        %v1809 = vsel %vm660, %v1804, 0
        %1811 = vmatprep.subr.bf16.mxu0 0
        %1812 = vmatpush1.bf16.msra.mxu0 0
        %1813 = vmatprep.subr.bf16.mxu0 0
        %1814 = vmatpush1.bf16.msra.mxu0 0
        %1815 = vmatprep.subr.bf16.mxu0 0
        %1816 = vmatpush1.bf16.msra.mxu0 0
        %1817 = vmatprep.subr.bf16.mxu0 0
        %1818 = vmatpush1.bf16.msra.mxu0 0
        %1819 = vmatprep.subr.bf16.mxu0 0
        %1820 = vmatpush1.bf16.msra.mxu0 0
        %1821 = vmatprep.subr.bf16.mxu0 0
        %1822 = vmatpush1.bf16.msra.mxu0 0
        %1823 = vmatprep.subr.bf16.mxu0 0
        %1824 = vmatpush1.bf16.msra.mxu0 0
        %1825 = vmatprep.subr.bf16.mxu0 0
        %1826 = vmatpush1.bf16.msra.mxu0 %v1809
        %1827 = vmatprep.subr.bf16.mxu0 0
        %1828 = vmatpush2.bf16.msra.mxu0 0
        %1829 = vmatprep.subr.bf16.mxu0 0
        %1830 = vmatpush2.bf16.msra.mxu0 0
        %1831 = vmatprep.subr.bf16.mxu0 0
        %1832 = vmatpush2.bf16.msra.mxu0 0
        %1833 = vmatprep.subr.bf16.mxu0 0
        %1834 = vmatpush2.bf16.msra.mxu0 0
        %1835 = vmatprep.subr.bf16.mxu0 0
        %1836 = vmatpush2.bf16.msra.mxu0 0
        %1837 = vmatprep.subr.bf16.mxu0 0
        %1838 = vmatpush2.bf16.msra.mxu0 0
        %1839 = vmatprep.subr.bf16.mxu0 0
        %1840 = vmatpush2.bf16.msra.mxu0 0
        %1841 = vmatprep.subr.bf16.mxu0 0
        %1842 = vmatpush2.bf16.msra.mxu0 0
        %1843 = vmatprep.mubr.bf16.mxu0 0
        %1844 = vmatmul.mubr.bf16.gmra.mxu0 %v1806
        %v1845 = vpop.f32.mrf.mxu0
        %v1846 = vadd.f32 0.0, %v1845
        %v1847 = vpop.f32.mrf.mxu0
        %v1848 = vpop.f32.mrf.mxu0
        %v1849 = vpop.f32.mrf.mxu0
        %1850 = vdwg.mxu0
        %v1851 = vpack.c.bf16 %v1750, %v1702
        %v1852 = vpack.c.bf16 %v1846, %v1798
        %s1853 = scalar_lea.vmem [#allocation8], 8
        %v1854 = vld [vmem:[%s1853] sm:$0xf]
        %v1856 = vsel %vm413, %v1851, 0
        %v1859 = vsel %vm413, %v1852, 0
        %v1862 = vsel %vm660, %v1854, 0
        %1864 = vmatprep.subr.bf16.mxu0 0
        %1865 = vmatpush1.bf16.msra.mxu0 0
        %1866 = vmatprep.subr.bf16.mxu0 0
        %1867 = vmatpush1.bf16.msra.mxu0 0
        %1868 = vmatprep.subr.bf16.mxu0 0
        %1869 = vmatpush1.bf16.msra.mxu0 0
        %1870 = vmatprep.subr.bf16.mxu0 0
        %1871 = vmatpush1.bf16.msra.mxu0 0
        %1872 = vmatprep.subr.bf16.mxu0 0
        %1873 = vmatpush1.bf16.msra.mxu0 0
        %1874 = vmatprep.subr.bf16.mxu0 0
        %1875 = vmatpush1.bf16.msra.mxu0 0
        %1876 = vmatprep.subr.bf16.mxu0 0
        %1877 = vmatpush1.bf16.msra.mxu0 0
        %1878 = vmatprep.subr.bf16.mxu0 0
        %1879 = vmatpush1.bf16.msra.mxu0 %v1862
        %1880 = vmatprep.subr.bf16.mxu0 0
        %1881 = vmatpush2.bf16.msra.mxu0 0
        %1882 = vmatprep.subr.bf16.mxu0 0
        %1883 = vmatpush2.bf16.msra.mxu0 0
        %1884 = vmatprep.subr.bf16.mxu0 0
        %1885 = vmatpush2.bf16.msra.mxu0 0
        %1886 = vmatprep.subr.bf16.mxu0 0
        %1887 = vmatpush2.bf16.msra.mxu0 0
        %1888 = vmatprep.subr.bf16.mxu0 0
        %1889 = vmatpush2.bf16.msra.mxu0 0
        %1890 = vmatprep.subr.bf16.mxu0 0
        %1891 = vmatpush2.bf16.msra.mxu0 0
        %1892 = vmatprep.subr.bf16.mxu0 0
        %1893 = vmatpush2.bf16.msra.mxu0 0
        %1894 = vmatprep.subr.bf16.mxu0 0
        %1895 = vmatpush2.bf16.msra.mxu0 0
        %1896 = vmatprep.mubr.bf16.mxu0 0
        %1897 = vmatmul.mubr.bf16.gmra.mxu0 %v1856
        %v1898 = vpop.f32.mrf.mxu0
        %v1899 = vadd.f32 0.0, %v1898
        %v1900 = vpop.f32.mrf.mxu0
        %v1901 = vpop.f32.mrf.mxu0
        %v1902 = vadd.f32 0.0, %v1901
        %v1903 = vpop.f32.mrf.mxu0
        %1904 = vmatprep.mubr.bf16.mxu0 0
        %1905 = vmatmul.mubr.bf16.gmra.mxu0 %v1859
        %v1906 = vpop.f32.mrf.mxu0
        %v1907 = vadd.f32 0.0, %v1906
        %v1908 = vpop.f32.mrf.mxu0
        %v1909 = vpop.f32.mrf.mxu0
        %v1910 = vadd.f32 0.0, %v1909
        %v1911 = vpop.f32.mrf.mxu0
        %1912 = vdwg.mxu0
        %v1913 = vadd.f32 %v1397, %v1899
        %v1914 = vadd.f32 %v1400, %v1902
        %v1915 = vadd.f32 %v1405, %v1907
        %v1916 = vadd.f32 %v1408, %v1910
        %1917 = vrot.lane.b32.xlu0 %v406, 104
        %v1918 = vpop.permute.xlu0 %1917
        %1919 = vrot.lane.b32.xlu0 %v406, 72
        %v1920 = vpop.permute.xlu0 %1919
        %v1922 = vsel %vm413, %v1918, 0
        %v1925 = vsel %vm413, %v1920, 0
        %1927 = vmatprep.subr.bf16.mxu0 0
        %1928 = vmatpush1.bf16.xpose.msra.mxu0 0
        %1929 = vmatprep.subr.bf16.mxu0 0
        %1930 = vmatpush1.bf16.xpose.msra.mxu0 0
        %1931 = vmatprep.subr.bf16.mxu0 0
        %1932 = vmatpush1.bf16.xpose.msra.mxu0 0
        %1933 = vmatprep.subr.bf16.mxu0 0
        %1934 = vmatpush1.bf16.xpose.msra.mxu0 0
        %1935 = vmatprep.subr.bf16.mxu0 0
        %1936 = vmatpush1.bf16.xpose.msra.mxu0 0
        %1937 = vmatprep.subr.bf16.mxu0 0
        %1938 = vmatpush1.bf16.xpose.msra.mxu0 0
        %1939 = vmatprep.subr.bf16.mxu0 0
        %1940 = vmatpush1.bf16.xpose.msra.mxu0 0
        %1941 = vmatprep.subr.bf16.mxu0 0
        %1942 = vmatpush1.bf16.xpose.msra.mxu0 %v1925
        %1943 = vmatprep.subr.bf16.mxu0 0
        %1944 = vmatpush2.bf16.xpose.msra.mxu0 0
        %1945 = vmatprep.subr.bf16.mxu0 0
        %1946 = vmatpush2.bf16.xpose.msra.mxu0 0
        %1947 = vmatprep.subr.bf16.mxu0 0
        %1948 = vmatpush2.bf16.xpose.msra.mxu0 0
        %1949 = vmatprep.subr.bf16.mxu0 0
        %1950 = vmatpush2.bf16.xpose.msra.mxu0 0
        %1951 = vmatprep.subr.bf16.mxu0 0
        %1952 = vmatpush2.bf16.xpose.msra.mxu0 0
        %1953 = vmatprep.subr.bf16.mxu0 0
        %1954 = vmatpush2.bf16.xpose.msra.mxu0 0
        %1955 = vmatprep.subr.bf16.mxu0 0
        %1956 = vmatpush2.bf16.xpose.msra.mxu0 0
        %1957 = vmatprep.subr.bf16.mxu0 0
        %1958 = vmatpush2.bf16.xpose.msra.mxu0 0
        %1959 = vmatprep.mubr.bf16.mxu0 0
        %1960 = vmatmul.mubr.bf16.gmra.mxu0 %v1922
        %v1961 = vpop.f32.mrf.mxu0
        %v1962 = vadd.f32 %v402, %v1961
        %v1963 = vpop.f32.mrf.mxu0
        %v1964 = vpop.f32.mrf.mxu0
        %v1965 = vpop.f32.mrf.mxu0
        %1966 = vdwg.mxu0
        %1967 = vrot.lane.b32.xlu0 %v407, 104
        %v1968 = vpop.permute.xlu0 %1967
        %1969 = vrot.lane.b32.xlu0 %v407, 72
        %v1970 = vpop.permute.xlu0 %1969
        %v1972 = vsel %vm413, %v1968, 0
        %v1975 = vsel %vm413, %v1970, 0
        %1977 = vmatprep.subr.bf16.mxu0 0
        %1978 = vmatpush1.bf16.xpose.msra.mxu0 0
        %1979 = vmatprep.subr.bf16.mxu0 0
        %1980 = vmatpush1.bf16.xpose.msra.mxu0 0
        %1981 = vmatprep.subr.bf16.mxu0 0
        %1982 = vmatpush1.bf16.xpose.msra.mxu0 0
        %1983 = vmatprep.subr.bf16.mxu0 0
        %1984 = vmatpush1.bf16.xpose.msra.mxu0 0
        %1985 = vmatprep.subr.bf16.mxu0 0
        %1986 = vmatpush1.bf16.xpose.msra.mxu0 0
        %1987 = vmatprep.subr.bf16.mxu0 0
        %1988 = vmatpush1.bf16.xpose.msra.mxu0 0
        %1989 = vmatprep.subr.bf16.mxu0 0
        %1990 = vmatpush1.bf16.xpose.msra.mxu0 0
        %1991 = vmatprep.subr.bf16.mxu0 0
        %1992 = vmatpush1.bf16.xpose.msra.mxu0 %v1975
        %1993 = vmatprep.subr.bf16.mxu0 0
        %1994 = vmatpush2.bf16.xpose.msra.mxu0 0
        %1995 = vmatprep.subr.bf16.mxu0 0
        %1996 = vmatpush2.bf16.xpose.msra.mxu0 0
        %1997 = vmatprep.subr.bf16.mxu0 0
        %1998 = vmatpush2.bf16.xpose.msra.mxu0 0
        %1999 = vmatprep.subr.bf16.mxu0 0
        %2000 = vmatpush2.bf16.xpose.msra.mxu0 0
        %2001 = vmatprep.subr.bf16.mxu0 0
        %2002 = vmatpush2.bf16.xpose.msra.mxu0 0
        %2003 = vmatprep.subr.bf16.mxu0 0
        %2004 = vmatpush2.bf16.xpose.msra.mxu0 0
        %2005 = vmatprep.subr.bf16.mxu0 0
        %2006 = vmatpush2.bf16.xpose.msra.mxu0 0
        %2007 = vmatprep.subr.bf16.mxu0 0
        %2008 = vmatpush2.bf16.xpose.msra.mxu0 0
        %2009 = vmatprep.mubr.bf16.mxu0 0
        %2010 = vmatmul.mubr.bf16.gmra.mxu0 %v1972
        %v2011 = vpop.f32.mrf.mxu0
        %v2012 = vadd.f32 %v403, %v2011
        %v2013 = vpop.f32.mrf.mxu0
        %v2014 = vpop.f32.mrf.mxu0
        %v2015 = vpop.f32.mrf.mxu0
        %2016 = vdwg.mxu0
        %2017 = vrot.lane.b32.xlu0 %v408, 104
        %v2018 = vpop.permute.xlu0 %2017
        %2019 = vrot.lane.b32.xlu0 %v408, 72
        %v2020 = vpop.permute.xlu0 %2019
        %v2022 = vsel %vm413, %v2018, 0
        %v2025 = vsel %vm413, %v2020, 0
        %2027 = vmatprep.subr.bf16.mxu0 0
        %2028 = vmatpush1.bf16.xpose.msra.mxu0 0
        %2029 = vmatprep.subr.bf16.mxu0 0
        %2030 = vmatpush1.bf16.xpose.msra.mxu0 0
        %2031 = vmatprep.subr.bf16.mxu0 0
        %2032 = vmatpush1.bf16.xpose.msra.mxu0 0
        %2033 = vmatprep.subr.bf16.mxu0 0
        %2034 = vmatpush1.bf16.xpose.msra.mxu0 0
        %2035 = vmatprep.subr.bf16.mxu0 0
        %2036 = vmatpush1.bf16.xpose.msra.mxu0 0
        %2037 = vmatprep.subr.bf16.mxu0 0
        %2038 = vmatpush1.bf16.xpose.msra.mxu0 0
        %2039 = vmatprep.subr.bf16.mxu0 0
        %2040 = vmatpush1.bf16.xpose.msra.mxu0 0
        %2041 = vmatprep.subr.bf16.mxu0 0
        %2042 = vmatpush1.bf16.xpose.msra.mxu0 %v2025
        %2043 = vmatprep.subr.bf16.mxu0 0
        %2044 = vmatpush2.bf16.xpose.msra.mxu0 0
        %2045 = vmatprep.subr.bf16.mxu0 0
        %2046 = vmatpush2.bf16.xpose.msra.mxu0 0
        %2047 = vmatprep.subr.bf16.mxu0 0
        %2048 = vmatpush2.bf16.xpose.msra.mxu0 0
        %2049 = vmatprep.subr.bf16.mxu0 0
        %2050 = vmatpush2.bf16.xpose.msra.mxu0 0
        %2051 = vmatprep.subr.bf16.mxu0 0
        %2052 = vmatpush2.bf16.xpose.msra.mxu0 0
        %2053 = vmatprep.subr.bf16.mxu0 0
        %2054 = vmatpush2.bf16.xpose.msra.mxu0 0
        %2055 = vmatprep.subr.bf16.mxu0 0
        %2056 = vmatpush2.bf16.xpose.msra.mxu0 0
        %2057 = vmatprep.subr.bf16.mxu0 0
        %2058 = vmatpush2.bf16.xpose.msra.mxu0 0
        %2059 = vmatprep.mubr.bf16.mxu0 0
        %2060 = vmatmul.mubr.bf16.gmra.mxu0 %v2022
        %v2061 = vpop.f32.mrf.mxu0
        %v2062 = vadd.f32 %v404, %v2061
        %v2063 = vpop.f32.mrf.mxu0
        %v2064 = vpop.f32.mrf.mxu0
        %v2065 = vpop.f32.mrf.mxu0
        %2066 = vdwg.mxu0
        %2067 = vrot.lane.b32.xlu0 %v409, 104
        %v2068 = vpop.permute.xlu0 %2067
        %2069 = vrot.lane.b32.xlu0 %v409, 72
        %v2070 = vpop.permute.xlu0 %2069
        %v2072 = vsel %vm413, %v2068, 0
        %v2075 = vsel %vm413, %v2070, 0
        %2077 = vmatprep.subr.bf16.mxu0 0
        %2078 = vmatpush1.bf16.xpose.msra.mxu0 0
        %2079 = vmatprep.subr.bf16.mxu0 0
        %2080 = vmatpush1.bf16.xpose.msra.mxu0 0
        %2081 = vmatprep.subr.bf16.mxu0 0
        %2082 = vmatpush1.bf16.xpose.msra.mxu0 0
        %2083 = vmatprep.subr.bf16.mxu0 0
        %2084 = vmatpush1.bf16.xpose.msra.mxu0 0
        %2085 = vmatprep.subr.bf16.mxu0 0
        %2086 = vmatpush1.bf16.xpose.msra.mxu0 0
        %2087 = vmatprep.subr.bf16.mxu0 0
        %2088 = vmatpush1.bf16.xpose.msra.mxu0 0
        %2089 = vmatprep.subr.bf16.mxu0 0
        %2090 = vmatpush1.bf16.xpose.msra.mxu0 0
        %2091 = vmatprep.subr.bf16.mxu0 0
        %2092 = vmatpush1.bf16.xpose.msra.mxu0 %v2075
        %2093 = vmatprep.subr.bf16.mxu0 0
        %2094 = vmatpush2.bf16.xpose.msra.mxu0 0
        %2095 = vmatprep.subr.bf16.mxu0 0
        %2096 = vmatpush2.bf16.xpose.msra.mxu0 0
        %2097 = vmatprep.subr.bf16.mxu0 0
        %2098 = vmatpush2.bf16.xpose.msra.mxu0 0
        %2099 = vmatprep.subr.bf16.mxu0 0
        %2100 = vmatpush2.bf16.xpose.msra.mxu0 0
        %2101 = vmatprep.subr.bf16.mxu0 0
        %2102 = vmatpush2.bf16.xpose.msra.mxu0 0
        %2103 = vmatprep.subr.bf16.mxu0 0
        %2104 = vmatpush2.bf16.xpose.msra.mxu0 0
        %2105 = vmatprep.subr.bf16.mxu0 0
        %2106 = vmatpush2.bf16.xpose.msra.mxu0 0
        %2107 = vmatprep.subr.bf16.mxu0 0
        %2108 = vmatpush2.bf16.xpose.msra.mxu0 0
        %2109 = vmatprep.mubr.bf16.mxu0 0
        %2110 = vmatmul.mubr.bf16.gmra.mxu0 %v2072
        %v2111 = vpop.f32.mrf.mxu0
        %v2112 = vadd.f32 %v405, %v2111
        %v2113 = vpop.f32.mrf.mxu0
        %v2114 = vpop.f32.mrf.mxu0
        %v2115 = vpop.f32.mrf.mxu0
        %2116 = vdwg.mxu0
        %v2117 = vsel %vm413, %v1962, -inf
        %2118 = vmax.xlane.f32.xlu0 %v2117
        %v2119 = vpop.xlane.xlu0 %2118
        %v2120 = vsel %vm413, %v2012, -inf
        %2121 = vmax.xlane.f32.xlu0 %v2120
        %v2122 = vpop.xlane.xlu0 %2121
        %v2123 = vsel %vm413, %v2062, -inf
        %2124 = vmax.xlane.f32.xlu0 %v2123
        %v2125 = vpop.xlane.xlu0 %2124
        %v2126 = vsel %vm413, %v2112, -inf
        %2127 = vmax.xlane.f32.xlu0 %v2126
        %v2128 = vpop.xlane.xlu0 %2127
        %v2129 = vsub.f32 %v1962, %v2119
        %v2130 = vsub.f32 %v2012, %v2122
        %v2131 = vsub.f32 %v2062, %v2125
        %v2132 = vsub.f32 %v2112, %v2128
        %v2133 = vmul.f32 %v2129, 1.442695
        %v2134 = vpow.pop %v2133
        %v2135 = vmul.f32 %v2130, 1.442695
        %v2136 = vpow.pop %v2135
        %v2137 = vmul.f32 %v2131, 1.442695
        %v2138 = vpow.pop %v2137
        %v2139 = vmul.f32 %v2132, 1.442695
        %v2140 = vpow.pop %v2139
        %v2141 = vsel %vm413, %v2134, 0.0
        %2142 = vadd.xlane.f32.xlu0 %v2141
        %v2143 = vpop.xlane.xlu0 %2142
        %v2144 = vsel %vm413, %v2136, 0.0
        %2145 = vadd.xlane.f32.xlu0 %v2144
        %v2146 = vpop.xlane.xlu0 %2145
        %v2147 = vsel %vm413, %v2138, 0.0
        %2148 = vadd.xlane.f32.xlu0 %v2147
        %v2149 = vpop.xlane.xlu0 %2148
        %v2150 = vsel %vm413, %v2140, 0.0
        %2151 = vadd.xlane.f32.xlu0 %v2150
        %v2152 = vpop.xlane.xlu0 %2151
        %v2153 = vrcp.pop %v2143
        %v2154 = vrcp.pop %v2146
        %v2155 = vrcp.pop %v2149
        %v2156 = vrcp.pop %v2152
        %v2157 = vmul.f32 %v2134, %v2153
        %v2158 = vmul.f32 %v2136, %v2154
        %v2159 = vmul.f32 %v2138, %v2155
        %v2160 = vmul.f32 %v2140, %v2156
        %v2161 = vpack.c.bf16 %v2157, %v2157
        %v2162 = vpack.c.bf16 %v2158, %v2158
        %v2163 = vpack.c.bf16 %v2159, %v2159
        %v2164 = vpack.c.bf16 %v2160, %v2160
        %2165 = vrot.lane.b32.xlu0 %v406, 40
        %v2166 = vpop.permute.xlu0 %2165
        %v2168 = vsel %vm413, %v2161, 0
        %v2171 = vsel %vm660, %v2166, 0
        %2173 = vmatprep.subr.bf16.mxu0 0
        %2174 = vmatpush1.bf16.msra.mxu0 0
        %2175 = vmatprep.subr.bf16.mxu0 0
        %2176 = vmatpush1.bf16.msra.mxu0 0
        %2177 = vmatprep.subr.bf16.mxu0 0
        %2178 = vmatpush1.bf16.msra.mxu0 0
        %2179 = vmatprep.subr.bf16.mxu0 0
        %2180 = vmatpush1.bf16.msra.mxu0 0
        %2181 = vmatprep.subr.bf16.mxu0 0
        %2182 = vmatpush1.bf16.msra.mxu0 0
        %2183 = vmatprep.subr.bf16.mxu0 0
        %2184 = vmatpush1.bf16.msra.mxu0 0
        %2185 = vmatprep.subr.bf16.mxu0 0
        %2186 = vmatpush1.bf16.msra.mxu0 0
        %2187 = vmatprep.subr.bf16.mxu0 0
        %2188 = vmatpush1.bf16.msra.mxu0 %v2171
        %2189 = vmatprep.subr.bf16.mxu0 0
        %2190 = vmatpush2.bf16.msra.mxu0 0
        %2191 = vmatprep.subr.bf16.mxu0 0
        %2192 = vmatpush2.bf16.msra.mxu0 0
        %2193 = vmatprep.subr.bf16.mxu0 0
        %2194 = vmatpush2.bf16.msra.mxu0 0
        %2195 = vmatprep.subr.bf16.mxu0 0
        %2196 = vmatpush2.bf16.msra.mxu0 0
        %2197 = vmatprep.subr.bf16.mxu0 0
        %2198 = vmatpush2.bf16.msra.mxu0 0
        %2199 = vmatprep.subr.bf16.mxu0 0
        %2200 = vmatpush2.bf16.msra.mxu0 0
        %2201 = vmatprep.subr.bf16.mxu0 0
        %2202 = vmatpush2.bf16.msra.mxu0 0
        %2203 = vmatprep.subr.bf16.mxu0 0
        %2204 = vmatpush2.bf16.msra.mxu0 0
        %2205 = vmatprep.mubr.bf16.mxu0 0
        %2206 = vmatmul.mubr.bf16.gmra.mxu0 %v2168
        %v2207 = vpop.f32.mrf.mxu0
        %v2208 = vadd.f32 0.0, %v2207
        %v2209 = vpop.f32.mrf.mxu0
        %v2210 = vpop.f32.mrf.mxu0
        %v2211 = vpop.f32.mrf.mxu0
        %2212 = vdwg.mxu0
        %2213 = vrot.lane.b32.xlu0 %v407, 40
        %v2214 = vpop.permute.xlu0 %2213
        %v2216 = vsel %vm413, %v2162, 0
        %v2219 = vsel %vm660, %v2214, 0
        %2221 = vmatprep.subr.bf16.mxu0 0
        %2222 = vmatpush1.bf16.msra.mxu0 0
        %2223 = vmatprep.subr.bf16.mxu0 0
        %2224 = vmatpush1.bf16.msra.mxu0 0
        %2225 = vmatprep.subr.bf16.mxu0 0
        %2226 = vmatpush1.bf16.msra.mxu0 0
        %2227 = vmatprep.subr.bf16.mxu0 0
        %2228 = vmatpush1.bf16.msra.mxu0 0
        %2229 = vmatprep.subr.bf16.mxu0 0
        %2230 = vmatpush1.bf16.msra.mxu0 0
        %2231 = vmatprep.subr.bf16.mxu0 0
        %2232 = vmatpush1.bf16.msra.mxu0 0
        %2233 = vmatprep.subr.bf16.mxu0 0
        %2234 = vmatpush1.bf16.msra.mxu0 0
        %2235 = vmatprep.subr.bf16.mxu0 0
        %2236 = vmatpush1.bf16.msra.mxu0 %v2219
        %2237 = vmatprep.subr.bf16.mxu0 0
        %2238 = vmatpush2.bf16.msra.mxu0 0
        %2239 = vmatprep.subr.bf16.mxu0 0
        %2240 = vmatpush2.bf16.msra.mxu0 0
        %2241 = vmatprep.subr.bf16.mxu0 0
        %2242 = vmatpush2.bf16.msra.mxu0 0
        %2243 = vmatprep.subr.bf16.mxu0 0
        %2244 = vmatpush2.bf16.msra.mxu0 0
        %2245 = vmatprep.subr.bf16.mxu0 0
        %2246 = vmatpush2.bf16.msra.mxu0 0
        %2247 = vmatprep.subr.bf16.mxu0 0
        %2248 = vmatpush2.bf16.msra.mxu0 0
        %2249 = vmatprep.subr.bf16.mxu0 0
        %2250 = vmatpush2.bf16.msra.mxu0 0
        %2251 = vmatprep.subr.bf16.mxu0 0
        %2252 = vmatpush2.bf16.msra.mxu0 0
        %2253 = vmatprep.mubr.bf16.mxu0 0
        %2254 = vmatmul.mubr.bf16.gmra.mxu0 %v2216
        %v2255 = vpop.f32.mrf.mxu0
        %v2256 = vadd.f32 0.0, %v2255
        %v2257 = vpop.f32.mrf.mxu0
        %v2258 = vpop.f32.mrf.mxu0
        %v2259 = vpop.f32.mrf.mxu0
        %2260 = vdwg.mxu0
        %2261 = vrot.lane.b32.xlu0 %v408, 40
        %v2262 = vpop.permute.xlu0 %2261
        %v2264 = vsel %vm413, %v2163, 0
        %v2267 = vsel %vm660, %v2262, 0
        %2269 = vmatprep.subr.bf16.mxu0 0
        %2270 = vmatpush1.bf16.msra.mxu0 0
        %2271 = vmatprep.subr.bf16.mxu0 0
        %2272 = vmatpush1.bf16.msra.mxu0 0
        %2273 = vmatprep.subr.bf16.mxu0 0
        %2274 = vmatpush1.bf16.msra.mxu0 0
        %2275 = vmatprep.subr.bf16.mxu0 0
        %2276 = vmatpush1.bf16.msra.mxu0 0
        %2277 = vmatprep.subr.bf16.mxu0 0
        %2278 = vmatpush1.bf16.msra.mxu0 0
        %2279 = vmatprep.subr.bf16.mxu0 0
        %2280 = vmatpush1.bf16.msra.mxu0 0
        %2281 = vmatprep.subr.bf16.mxu0 0
        %2282 = vmatpush1.bf16.msra.mxu0 0
        %2283 = vmatprep.subr.bf16.mxu0 0
        %2284 = vmatpush1.bf16.msra.mxu0 %v2267
        %2285 = vmatprep.subr.bf16.mxu0 0
        %2286 = vmatpush2.bf16.msra.mxu0 0
        %2287 = vmatprep.subr.bf16.mxu0 0
        %2288 = vmatpush2.bf16.msra.mxu0 0
        %2289 = vmatprep.subr.bf16.mxu0 0
        %2290 = vmatpush2.bf16.msra.mxu0 0
        %2291 = vmatprep.subr.bf16.mxu0 0
        %2292 = vmatpush2.bf16.msra.mxu0 0
        %2293 = vmatprep.subr.bf16.mxu0 0
        %2294 = vmatpush2.bf16.msra.mxu0 0
        %2295 = vmatprep.subr.bf16.mxu0 0
        %2296 = vmatpush2.bf16.msra.mxu0 0
        %2297 = vmatprep.subr.bf16.mxu0 0
        %2298 = vmatpush2.bf16.msra.mxu0 0
        %2299 = vmatprep.subr.bf16.mxu0 0
        %2300 = vmatpush2.bf16.msra.mxu0 0
        %2301 = vmatprep.mubr.bf16.mxu0 0
        %2302 = vmatmul.mubr.bf16.gmra.mxu0 %v2264
        %v2303 = vpop.f32.mrf.mxu0
        %v2304 = vadd.f32 0.0, %v2303
        %v2305 = vpop.f32.mrf.mxu0
        %v2306 = vpop.f32.mrf.mxu0
        %v2307 = vpop.f32.mrf.mxu0
        %2308 = vdwg.mxu0
        %2309 = vrot.lane.b32.xlu0 %v409, 40
        %v2310 = vpop.permute.xlu0 %2309
        %v2312 = vsel %vm413, %v2164, 0
        %v2315 = vsel %vm660, %v2310, 0
        %2317 = vmatprep.subr.bf16.mxu0 0
        %2318 = vmatpush1.bf16.msra.mxu0 0
        %2319 = vmatprep.subr.bf16.mxu0 0
        %2320 = vmatpush1.bf16.msra.mxu0 0
        %2321 = vmatprep.subr.bf16.mxu0 0
        %2322 = vmatpush1.bf16.msra.mxu0 0
        %2323 = vmatprep.subr.bf16.mxu0 0
        %2324 = vmatpush1.bf16.msra.mxu0 0
        %2325 = vmatprep.subr.bf16.mxu0 0
        %2326 = vmatpush1.bf16.msra.mxu0 0
        %2327 = vmatprep.subr.bf16.mxu0 0
        %2328 = vmatpush1.bf16.msra.mxu0 0
        %2329 = vmatprep.subr.bf16.mxu0 0
        %2330 = vmatpush1.bf16.msra.mxu0 0
        %2331 = vmatprep.subr.bf16.mxu0 0
        %2332 = vmatpush1.bf16.msra.mxu0 %v2315
        %2333 = vmatprep.subr.bf16.mxu0 0
        %2334 = vmatpush2.bf16.msra.mxu0 0
        %2335 = vmatprep.subr.bf16.mxu0 0
        %2336 = vmatpush2.bf16.msra.mxu0 0
        %2337 = vmatprep.subr.bf16.mxu0 0
        %2338 = vmatpush2.bf16.msra.mxu0 0
        %2339 = vmatprep.subr.bf16.mxu0 0
        %2340 = vmatpush2.bf16.msra.mxu0 0
        %2341 = vmatprep.subr.bf16.mxu0 0
        %2342 = vmatpush2.bf16.msra.mxu0 0
        %2343 = vmatprep.subr.bf16.mxu0 0
        %2344 = vmatpush2.bf16.msra.mxu0 0
        %2345 = vmatprep.subr.bf16.mxu0 0
        %2346 = vmatpush2.bf16.msra.mxu0 0
        %2347 = vmatprep.subr.bf16.mxu0 0
        %2348 = vmatpush2.bf16.msra.mxu0 0
        %2349 = vmatprep.mubr.bf16.mxu0 0
        %2350 = vmatmul.mubr.bf16.gmra.mxu0 %v2312
        %v2351 = vpop.f32.mrf.mxu0
        %v2352 = vadd.f32 0.0, %v2351
        %v2353 = vpop.f32.mrf.mxu0
        %v2354 = vpop.f32.mrf.mxu0
        %v2355 = vpop.f32.mrf.mxu0
        %2356 = vdwg.mxu0
        %v2357 = vpack.c.bf16 %v2256, %v2208
        %v2358 = vpack.c.bf16 %v2352, %v2304
        %s2359 = scalar_lea.vmem [#allocation8], 12
        %v2360 = vld [vmem:[%s2359] sm:$0xf]
        %v2362 = vsel %vm413, %v2357, 0
        %v2365 = vsel %vm413, %v2358, 0
        %v2368 = vsel %vm660, %v2360, 0
        %2370 = vmatprep.subr.bf16.mxu0 0
        %2371 = vmatpush1.bf16.msra.mxu0 0
        %2372 = vmatprep.subr.bf16.mxu0 0
        %2373 = vmatpush1.bf16.msra.mxu0 0
        %2374 = vmatprep.subr.bf16.mxu0 0
        %2375 = vmatpush1.bf16.msra.mxu0 0
        %2376 = vmatprep.subr.bf16.mxu0 0
        %2377 = vmatpush1.bf16.msra.mxu0 0
        %2378 = vmatprep.subr.bf16.mxu0 0
        %2379 = vmatpush1.bf16.msra.mxu0 0
        %2380 = vmatprep.subr.bf16.mxu0 0
        %2381 = vmatpush1.bf16.msra.mxu0 0
        %2382 = vmatprep.subr.bf16.mxu0 0
        %2383 = vmatpush1.bf16.msra.mxu0 0
        %2384 = vmatprep.subr.bf16.mxu0 0
        %2385 = vmatpush1.bf16.msra.mxu0 %v2368
        %2386 = vmatprep.subr.bf16.mxu0 0
        %2387 = vmatpush2.bf16.msra.mxu0 0
        %2388 = vmatprep.subr.bf16.mxu0 0
        %2389 = vmatpush2.bf16.msra.mxu0 0
        %2390 = vmatprep.subr.bf16.mxu0 0
        %2391 = vmatpush2.bf16.msra.mxu0 0
        %2392 = vmatprep.subr.bf16.mxu0 0
        %2393 = vmatpush2.bf16.msra.mxu0 0
        %2394 = vmatprep.subr.bf16.mxu0 0
        %2395 = vmatpush2.bf16.msra.mxu0 0
        %2396 = vmatprep.subr.bf16.mxu0 0
        %2397 = vmatpush2.bf16.msra.mxu0 0
        %2398 = vmatprep.subr.bf16.mxu0 0
        %2399 = vmatpush2.bf16.msra.mxu0 0
        %2400 = vmatprep.subr.bf16.mxu0 0
        %2401 = vmatpush2.bf16.msra.mxu0 0
        %2402 = vmatprep.mubr.bf16.mxu0 0
        %2403 = vmatmul.mubr.bf16.gmra.mxu0 %v2362
        %v2404 = vpop.f32.mrf.mxu0
        %v2405 = vadd.f32 0.0, %v2404
        %v2406 = vpop.f32.mrf.mxu0
        %v2407 = vpop.f32.mrf.mxu0
        %v2408 = vadd.f32 0.0, %v2407
        %v2409 = vpop.f32.mrf.mxu0
        %2410 = vmatprep.mubr.bf16.mxu0 0
        %2411 = vmatmul.mubr.bf16.gmra.mxu0 %v2365
        %v2412 = vpop.f32.mrf.mxu0
        %v2413 = vadd.f32 0.0, %v2412
        %v2414 = vpop.f32.mrf.mxu0
        %v2415 = vpop.f32.mrf.mxu0
        %v2416 = vadd.f32 0.0, %v2415
        %v2417 = vpop.f32.mrf.mxu0
        %2418 = vdwg.mxu0
        %v2419 = vadd.f32 %v1913, %v2405
        %v2420 = vadd.f32 %v1914, %v2408
        %v2421 = vadd.f32 %v1915, %v2413
        %v2422 = vadd.f32 %v1916, %v2416
        %v2423 = vld [vmem:[%s4] sm:$0x1]
        %v2425 = vlaneseq
        %v2426 = vshrl.u32 %v2425, 7
        %v2427 = vsub.s32 0, %v2426
        %v2428 = vrot.slane %v2423, %v2427
        %v2430 = vadd.f32 %v2419, %v2428
        %v2431 = vadd.f32 %v2420, %v2428
        %v2432 = vadd.f32 %v2421, %v2428
        %v2433 = vadd.f32 %v2422, %v2428
        %2434 = vst.msk [vmem:[%s311] sm:$0xff] %vm346, %v2430
        %2435 = vst.msk [vmem:[%s311 + $0x8] sm:$0xff] %vm346, %v2431
        %2436 = vst.msk [vmem:[%s311 + $0x10] sm:$0xff] %vm346, %v2432
        %2437 = vst.msk [vmem:[%s311 + $0x18] sm:$0xff] %vm346, %v2433
        %s2438 = sand.u32 %s149, 1
        %s2439 = scalar_lea.sflag [#allocation4], %s2438
        %s2440 = sand.u32 %s149, 1
        %s2441 = smul.addr %s2440, 32
        %s2442 = scalar_lea.vmem [#allocation10], %s2441
        // Predicated region
        $region57: #{tpu_custom_call.1} parent=39 // pred_check
          %p2443 = pneg %p159
        $region58: #{tpu_custom_call.1} parent=39 // pred_check_branch
          %2445 = sbr.rel (%p2443) target = $region60
        $region59: #{tpu_custom_call.1} parent=39 // pred_region
          %s2446 = smul.u32 4, %s26
          %s2448 = ssub.s32 512, 512
          %2449 = vsyncadd %s2439, %s2448
          %s2450 = smul.addr %s2446, 128
          %s2451 = scalar_lea.hbm %s5, %s2450
          %s2452 = sshll.u32 %s2442, 4
          %s2453 = int_to_ptr.vmem [resolvable:$true] %s2452
          %2458 = dma.vmem_to_hbm [thread:$0]  %s2453, 512, %s2451, %s2439, 128, 128, 8
        $region60: #{tpu_custom_call.1} parent=39 // pred_fallthru
          _
      $region40: #{tpu_custom_call.1} parent=5 // pred_fallthru
        _
      %p2459 = scmp.le.s32.totalorder 2, %s21
      // Predicated region
      $region61: #{tpu_custom_call.1} parent=5 // pred_check
        %p2460 = pneg %p2459
      $region62: #{tpu_custom_call.1} parent=5 // pred_check_branch
        %2462 = sbr.rel (%p2460) target = $region64
      $region63: #{tpu_custom_call.1} parent=5 // pred_region
        %s2463 = ssub.s32 %s21, 2
        // Predicated region
        $region65: #{tpu_custom_call.1} parent=63 // pred_check
          %p2464 = pneg %p165
        $region66: #{tpu_custom_call.1} parent=63 // pred_check_branch
          %2466 = sbr.rel (%p2464) target = $region68
        $region67: #{tpu_custom_call.1} parent=63 // pred_region
          %s2467 = sand.u32 %s150, 1
          %s2468 = scalar_lea.sflag [#allocation4], %s2467
          %s2469 = sand.u32 %s150, 1
          %s2470 = smul.addr %s2469, 32
          %s2471 = scalar_lea.vmem [#allocation10], %s2470
          %2472 = dma.done %s2468, 512
        $region68: #{tpu_custom_call.1} parent=63 // pred_fallthru
          _
      $region64: #{tpu_custom_call.1} parent=5 // pred_fallthru
        _
    $region6: #{tpu_custom_call.1} parent=1 // loop_footer
      %s25 = sadd.s32 1, %s21
    $region7: #{tpu_custom_call.1} parent=1 // loop_footer_branch
      %20 = sbr.rel target = $region3
    $region8: #{tpu_custom_call.1} parent=1 // loop_exit
      _
    %2473 = vsyncpa [#allocation3], 1
    %s2474 = scalar_lea.sflag [#allocation3], 1
    %2475 = vsyncpa %s2474, 1
    %2476 = vsyncpa [#allocation6], 1
    %s2477 = scalar_lea.sflag [#allocation6], 1
    %2478 = vsyncpa %s2477, 1
    %2479 = vsyncpa [#allocation9], 1
    %2480 = vsyncpa [#allocation4], 1
    %s2481 = scalar_lea.sflag [#allocation4], 1
    %2482 = vsyncpa %s2481, 1

</llo_original>
